<compile_context>
chip_gen: v7x
topology: tpu7x:2x2x1
jax: 0.10.0
libtpu: 0.0.40
codegen_flags: <defaults>
</compile_context>

<pallas_src>
import jax
import jax.numpy as jnp
import numpy as np
from jax import lax
from jax.experimental import pallas as pl
from jax.experimental.pallas import tpu as pltpu

EPS = 1e-5
GROUPS = 4


# ----------------------------- fused Pallas kernel -----------------------------

def _make_mid_block_kernel(C, H, W, groups, eps):
    HW = H * W
    Cg = C // groups
    offsets = [(di, dj) for di in (-1, 0, 1) for dj in (-1, 0, 1)]
    inv_cnt = 1.0 / float(Cg * HW)

    def gn_silu(x, same, gamma, beta):
        # x: (C, HW) f32.  Row c of (same @ x) is the per-position sum over c's
        # group, so group stats need no in-kernel reshape.
        gsum = jnp.dot(same, x, preferred_element_type=jnp.float32)      # (C, HW)
        mean = jnp.sum(gsum, axis=1, keepdims=True) * inv_cnt            # (C, 1)
        d = x - mean                                                     # two-pass variance
        gss = jnp.dot(same, d * d, preferred_element_type=jnp.float32)
        var = jnp.sum(gss, axis=1, keepdims=True) * inv_cnt
        y = d * lax.rsqrt(var + eps) * gamma + beta
        return y * jax.nn.sigmoid(y)                                     # SiLU

    def conv3x3(h, mask_ref, w, bias):
        # In-VMEM im2col: for tap (di,dj), rotate lanes so column p holds
        # h[c, p + di*W + dj], zero out-of-image positions, stack to (9C, HW),
        # one bf16 MXU matmul with f32 accumulation.  Output is lane-dense.
        taps = []
        for t, (di, dj) in enumerate(offsets):
            off = di * W + dj
            a = off % HW
            s = h if a == 0 else jnp.concatenate([h[:, a:], h[:, :a]], axis=1)
            taps.append(s * mask_ref[t])                                 # (C,HW) * (1,HW)
        p = jnp.concatenate(taps, axis=0).astype(jnp.bfloat16)           # (9C, HW)
        acc = jnp.dot(w, p, preferred_element_type=jnp.float32)          # (Cout, HW)
        return acc + bias

    def kernel(x_ref, res_ref, same_ref, mask_ref,
               g1_ref, be1_ref, w1_ref, b1_ref,
               g2_ref, be2_ref, w2_ref, b2_ref, o_ref):
        x = x_ref[0].astype(jnp.float32)                                 # (C, HW)
        same = same_ref[...]                                             # (C, C)
        h = gn_silu(x, same, g1_ref[...], be1_ref[...])
        h = conv3x3(h, mask_ref, w1_ref[...], b1_ref[...])
        h = gn_silu(h, same, g2_ref[...], be2_ref[...])
        h = conv3x3(h, mask_ref, w2_ref[...], b2_ref[...])
        # fused epilogue: resnet skip (+x) and the MidBlockWrapper residual add
        o_ref[0] = (x + h + res_ref[0].astype(jnp.float32)).astype(o_ref.dtype)

    return kernel


# ----------------------------- host-side constants / weight prep -----------------------------

def _tap_masks(H, W):
    # (9, 1, HW) f32 validity masks for the 9 conv taps (zero padding).
    HW = H * W
    r, c = np.divmod(np.arange(HW), W)
    m = []
    for di in (-1, 0, 1):
        for dj in (-1, 0, 1):
            ok = (r + di >= 0) & (r + di < H) & (c + dj >= 0) & (c + dj < W)
            m.append(ok.astype(np.float32))
    return jnp.asarray(np.stack(m).reshape(9, 1, HW))


def _same_group(C, groups):
    g = np.arange(C) // (C // groups)
    return jnp.asarray((g[:, None] == g[None, :]).astype(np.float32))


def _prep_conv_w(w_oihw):
    # (Cout, Cin, 3, 3) -> (Cout, 9*Cin) bf16, (ki, kj, cin)-major so rows of the
    # in-kernel patch stack line up with the reduction dimension.
    Cout, Cin = w_oihw.shape[0], w_oihw.shape[1]
    return jnp.transpose(w_oihw, (0, 2, 3, 1)).reshape(Cout, 9 * Cin).astype(jnp.bfloat16)


# ----------------------------- wrapper -----------------------------

def mid_block_wrapper_forward(params, x, residual, *, groups=GROUPS):
    """out = mid_block(x) + residual, fully fused in one pallas_call."""
    N, C, H, W = x.shape
    HW = H * W

    x2 = x.reshape(N, C, HW)              # free: NCHW flattens straight to (C, HW)
    r2 = residual.reshape(N, C, HW)

    same = _same_group(C, groups)
    masks = _tap_masks(H, W)
    w1 = _prep_conv_w(params["w1"])
    w2 = _prep_conv_w(params["w2"])
    col = lambda v: v.reshape(C, 1).astype(jnp.float32)

    kernel = _make_mid_block_kernel(C, H, W, groups, EPS)

    img_spec = pl.BlockSpec((1, C, HW), lambda n: (n, 0, 0))
    col_spec = pl.BlockSpec((C, 1), lambda n: (0, 0))
    w_spec = pl.BlockSpec((C, 9 * C), lambda n: (0, 0))
    same_spec = pl.BlockSpec((C, C), lambda n: (0, 0))
    mask_spec = pl.BlockSpec((9, 1, HW), lambda n: (0, 0, 0))

    out = pl.pallas_call(
        kernel,
        out_shape=jax.ShapeDtypeStruct((N, C, HW), x.dtype),
        grid=(N,),
        in_specs=[img_spec, img_spec, same_spec, mask_spec,
                  col_spec, col_spec, w_spec, col_spec,
                  col_spec, col_spec, w_spec, col_spec],
        out_specs=img_spec,
        compiler_params=pltpu.CompilerParams(
            dimension_semantics=("parallel",)),   # N blocks -> both TCs on v7x
    )(x2, r2, same, masks,
      col(params["gamma1"]), col(params["beta1"]), w1, col(params["b1"]),
      col(params["gamma2"]), col(params["beta2"]), w2, col(params["b2"]))

    return out.reshape(N, C, H, W)


# ----------------------------- pure-JAX reference -----------------------------

def _ref_forward(params, x, residual):
    def gn_silu(t, g, b):
        N, C, H, W = t.shape
        tg = t.reshape(N, GROUPS, -1)
        mean = tg.mean(-1, keepdims=True)
        var = tg.var(-1, keepdims=True)
        tn = ((tg - mean) / jnp.sqrt(var + EPS)).reshape(N, C, H, W)
        y = tn * g.reshape(1, C, 1, 1) + b.reshape(1, C, 1, 1)
        return y * jax.nn.sigmoid(y)

    def conv(t, w, b):
        y = lax.conv_general_dilated(t, w, (1, 1), ((1, 1), (1, 1)),
                                     dimension_numbers=("NCHW", "OIHW", "NCHW"))
        return y + b.reshape(1, -1, 1, 1)

    h = gn_silu(x, params["gamma1"], params["beta1"])
    h = conv(h, params["w1"], params["b1"])
    h = gn_silu(h, params["gamma2"], params["beta2"])
    h = conv(h, params["w2"], params["b2"])
    return x + h + residual


# ----------------------------- main -----------------------------

if __name__ == "__main__":
    key = jax.random.PRNGKey(0)
    N, C, H, W = 2, 8, 16, 16
    ks = jax.random.split(key, 10)

    x = jax.random.normal(ks[0], (N, C, H, W), jnp.float32)
    residual = jax.random.normal(ks[1], (N, C, H, W), jnp.float32)

    params = dict(
        gamma1=1.0 + 0.1 * jax.random.normal(ks[2], (C,), jnp.float32),
        beta1=0.1 * jax.random.normal(ks[3], (C,), jnp.float32),
        w1=0.1 * jax.random.normal(ks[4], (C, C, 3, 3), jnp.float32),
        b1=0.05 * jax.random.normal(ks[5], (C,), jnp.float32),
        gamma2=1.0 + 0.1 * jax.random.normal(ks[6], (C,), jnp.float32),
        beta2=0.1 * jax.random.normal(ks[7], (C,), jnp.float32),
        w2=0.1 * jax.random.normal(ks[8], (C, C, 3, 3), jnp.float32),
        b2=0.05 * jax.random.normal(ks[9], (C,), jnp.float32),
    )

    out = jax.jit(mid_block_wrapper_forward)(params, x, residual)
    out = jax.block_until_ready(out)

    ref = _ref_forward(params, x, residual)
    err = float(jnp.max(jnp.abs(out - ref)))
    assert out.shape == (N, C, H, W)
    # tolerance accounts for bf16 MXU inputs in the conv matmuls (f32 reference)
    assert jnp.allclose(out, ref, atol=5e-2, rtol=5e-2), err

    print("KERNEL_OK")
</pallas_src>

<mosaic_0001>
module attributes {stable_mosaic.version = 11 : i64} {
  func.func @kernel(%arg0: i32, %arg1: memref<1x8x256xf32, #tpu.memory_space<vmem>>, %arg2: memref<1x8x256xf32, #tpu.memory_space<vmem>>, %arg3: memref<8x8xf32, #tpu.memory_space<vmem>>, %arg4: memref<9x1x256xf32, #tpu.memory_space<vmem>>, %arg5: memref<8x1xf32, #tpu.memory_space<vmem>>, %arg6: memref<8x1xf32, #tpu.memory_space<vmem>>, %arg7: memref<8x72xbf16, #tpu.memory_space<vmem>>, %arg8: memref<8x1xf32, #tpu.memory_space<vmem>>, %arg9: memref<8x1xf32, #tpu.memory_space<vmem>>, %arg10: memref<8x1xf32, #tpu.memory_space<vmem>>, %arg11: memref<8x72xbf16, #tpu.memory_space<vmem>>, %arg12: memref<8x1xf32, #tpu.memory_space<vmem>>, %arg13: memref<1x8x256xf32, #tpu.memory_space<vmem>>) attributes {dimension_semantics = [#tpu.dimension_semantics<parallel>], iteration_bounds = array<i64: 2>, scalar_prefetch = 0 : i64, scratch_operands = 0 : i64, tpu.core_type = #tpu.core_type<tc>, window_params = [{transform_indices = @transform_0, window_bounds = array<i64: 1, 8, 256>}, {transform_indices = @transform_1, window_bounds = array<i64: 1, 8, 256>}, {pipeline_mode = #tpu.pipeline_mode<synchronous>, transform_indices = @transform_2, window_bounds = array<i64: 8, 8>}, {pipeline_mode = #tpu.pipeline_mode<synchronous>, transform_indices = @transform_3, window_bounds = array<i64: 9, 1, 256>}, {pipeline_mode = #tpu.pipeline_mode<synchronous>, transform_indices = @transform_4, window_bounds = array<i64: 8, 1>}, {pipeline_mode = #tpu.pipeline_mode<synchronous>, transform_indices = @transform_5, window_bounds = array<i64: 8, 1>}, {pipeline_mode = #tpu.pipeline_mode<synchronous>, transform_indices = @transform_6, window_bounds = array<i64: 8, 72>}, {pipeline_mode = #tpu.pipeline_mode<synchronous>, transform_indices = @transform_7, window_bounds = array<i64: 8, 1>}, {pipeline_mode = #tpu.pipeline_mode<synchronous>, transform_indices = @transform_8, window_bounds = array<i64: 8, 1>}, {pipeline_mode = #tpu.pipeline_mode<synchronous>, transform_indices = @transform_9, window_bounds = array<i64: 8, 1>}, {pipeline_mode = #tpu.pipeline_mode<synchronous>, transform_indices = @transform_10, window_bounds = array<i64: 8, 72>}, {pipeline_mode = #tpu.pipeline_mode<synchronous>, transform_indices = @transform_11, window_bounds = array<i64: 8, 1>}, {transform_indices = @transform_12, window_bounds = array<i64: 1, 8, 256>}]} {
    %c0 = arith.constant 0 : index
    %c0_0 = arith.constant 0 : index
    %c0_1 = arith.constant 0 : index
    %0 = vector.load %arg1[%c0, %c0_0, %c0_1] : memref<1x8x256xf32, #tpu.memory_space<vmem>>, vector<1x8x256xf32>
    %1 = vector.shape_cast %0 : vector<1x8x256xf32> to vector<8x256xf32>
    %c0_2 = arith.constant 0 : index
    %c0_3 = arith.constant 0 : index
    %2 = vector.load %arg3[%c0_2, %c0_3] : memref<8x8xf32, #tpu.memory_space<vmem>>, vector<8x8xf32>
    %c0_4 = arith.constant 0 : index
    %c0_5 = arith.constant 0 : index
    %3 = vector.load %arg5[%c0_4, %c0_5] : memref<8x1xf32, #tpu.memory_space<vmem>>, vector<8x1xf32>
    %c0_6 = arith.constant 0 : index
    %c0_7 = arith.constant 0 : index
    %4 = vector.load %arg6[%c0_6, %c0_7] : memref<8x1xf32, #tpu.memory_space<vmem>>, vector<8x1xf32>
    %cst = arith.constant dense<0.000000e+00> : vector<8x256xf32>
    %5 = tpu.matmul %2, %1, %cst {dimension_numbers = #tpu.dot_dimension_numbers<[1], [0], [0], [1], [0, 0, 1, 1], [], []>} : vector<8x8xf32>, vector<8x256xf32>, vector<8x256xf32> -> vector<8x256xf32>
    %cst_8 = arith.constant dense<0.000000e+00> : vector<8xf32>
    %6 = vector.multi_reduction <add>, %5, %cst_8 [1] : vector<8x256xf32> to vector<8xf32>
    %7 = vector.shape_cast %6 : vector<8xf32> to vector<8x1xf32>
    %cst_9 = arith.constant 0.001953125 : f32
    %8 = vector.broadcast %cst_9 : f32 to vector<8x1xf32>
    %9 = arith.mulf %7, %8 : vector<8x1xf32>
    %10 = vector.broadcast %9 : vector<8x1xf32> to vector<8x256xf32>
    %11 = arith.subf %1, %10 : vector<8x256xf32>
    %12 = arith.mulf %11, %11 : vector<8x256xf32>
    %cst_10 = arith.constant dense<0.000000e+00> : vector<8x256xf32>
    %13 = tpu.matmul %2, %12, %cst_10 {dimension_numbers = #tpu.dot_dimension_numbers<[1], [0], [0], [1], [0, 0, 1, 1], [], []>} : vector<8x8xf32>, vector<8x256xf32>, vector<8x256xf32> -> vector<8x256xf32>
    %cst_11 = arith.constant dense<0.000000e+00> : vector<8xf32>
    %14 = vector.multi_reduction <add>, %13, %cst_11 [1] : vector<8x256xf32> to vector<8xf32>
    %15 = vector.shape_cast %14 : vector<8xf32> to vector<8x1xf32>
    %cst_12 = arith.constant 0.001953125 : f32
    %16 = vector.broadcast %cst_12 : f32 to vector<8x1xf32>
    %17 = arith.mulf %15, %16 : vector<8x1xf32>
    %cst_13 = arith.constant 9.99999974E-6 : f32
    %18 = vector.broadcast %cst_13 : f32 to vector<8x1xf32>
    %19 = arith.addf %17, %18 : vector<8x1xf32>
    %20 = math.rsqrt %19 : vector<8x1xf32>
    %21 = vector.broadcast %20 : vector<8x1xf32> to vector<8x256xf32>
    %22 = arith.mulf %11, %21 : vector<8x256xf32>
    %23 = vector.broadcast %3 : vector<8x1xf32> to vector<8x256xf32>
    %24 = arith.mulf %22, %23 : vector<8x256xf32>
    %25 = vector.broadcast %4 : vector<8x1xf32> to vector<8x256xf32>
    %26 = arith.addf %24, %25 : vector<8x256xf32>
    %27 = arith.negf %26 : vector<8x256xf32>
    %28 = math.exp %27 : vector<8x256xf32>
    %cst_14 = arith.constant 1.000000e+00 : f32
    %29 = vector.broadcast %cst_14 : f32 to vector<8x256xf32>
    %30 = arith.addf %29, %28 : vector<8x256xf32>
    %31 = arith.divf %29, %30 : vector<8x256xf32>
    %32 = arith.mulf %26, %31 : vector<8x256xf32>
    %c0_15 = arith.constant 0 : index
    %c0_16 = arith.constant 0 : index
    %33 = vector.load %arg7[%c0_15, %c0_16] : memref<8x72xbf16, #tpu.memory_space<vmem>>, vector<8x72xbf16>
    %c0_17 = arith.constant 0 : index
    %c0_18 = arith.constant 0 : index
    %34 = vector.load %arg8[%c0_17, %c0_18] : memref<8x1xf32, #tpu.memory_space<vmem>>, vector<8x1xf32>
    %35 = vector.extract_strided_slice %32 {offsets = [0, 239], sizes = [8, 17], strides = [1, 1]} : vector<8x256xf32> to vector<8x17xf32>
    %36 = vector.extract_strided_slice %32 {offsets = [0, 0], sizes = [8, 239], strides = [1, 1]} : vector<8x256xf32> to vector<8x239xf32>
    %37 = tpu.concatenate %35, %36 in 1 : vector<8x17xf32>, vector<8x239xf32> -> vector<8x256xf32>
    %c0_19 = arith.constant 0 : index
    %c0_20 = arith.constant 0 : index
    %c0_21 = arith.constant 0 : index
    %38 = vector.load %arg4[%c0_19, %c0_20, %c0_21] : memref<9x1x256xf32, #tpu.memory_space<vmem>>, vector<1x1x256xf32>
    %39 = vector.shape_cast %38 : vector<1x1x256xf32> to vector<1x256xf32>
    %40 = vector.broadcast %39 : vector<1x256xf32> to vector<8x256xf32>
    %41 = arith.mulf %37, %40 : vector<8x256xf32>
    %42 = vector.extract_strided_slice %32 {offsets = [0, 240], sizes = [8, 16], strides = [1, 1]} : vector<8x256xf32> to vector<8x16xf32>
    %43 = vector.extract_strided_slice %32 {offsets = [0, 0], sizes = [8, 240], strides = [1, 1]} : vector<8x256xf32> to vector<8x240xf32>
    %44 = tpu.concatenate %42, %43 in 1 : vector<8x16xf32>, vector<8x240xf32> -> vector<8x256xf32>
    %c1 = arith.constant 1 : index
    %c0_22 = arith.constant 0 : index
    %c0_23 = arith.constant 0 : index
    %45 = vector.load %arg4[%c1, %c0_22, %c0_23] : memref<9x1x256xf32, #tpu.memory_space<vmem>>, vector<1x1x256xf32>
    %46 = vector.shape_cast %45 : vector<1x1x256xf32> to vector<1x256xf32>
    %47 = vector.broadcast %46 : vector<1x256xf32> to vector<8x256xf32>
    %48 = arith.mulf %44, %47 : vector<8x256xf32>
    %49 = vector.extract_strided_slice %32 {offsets = [0, 241], sizes = [8, 15], strides = [1, 1]} : vector<8x256xf32> to vector<8x15xf32>
    %50 = vector.extract_strided_slice %32 {offsets = [0, 0], sizes = [8, 241], strides = [1, 1]} : vector<8x256xf32> to vector<8x241xf32>
    %51 = tpu.concatenate %49, %50 in 1 : vector<8x15xf32>, vector<8x241xf32> -> vector<8x256xf32>
    %c2 = arith.constant 2 : index
    %c0_24 = arith.constant 0 : index
    %c0_25 = arith.constant 0 : index
    %52 = vector.load %arg4[%c2, %c0_24, %c0_25] : memref<9x1x256xf32, #tpu.memory_space<vmem>>, vector<1x1x256xf32>
    %53 = vector.shape_cast %52 : vector<1x1x256xf32> to vector<1x256xf32>
    %54 = vector.broadcast %53 : vector<1x256xf32> to vector<8x256xf32>
    %55 = arith.mulf %51, %54 : vector<8x256xf32>
    %56 = vector.extract_strided_slice %32 {offsets = [0, 255], sizes = [8, 1], strides = [1, 1]} : vector<8x256xf32> to vector<8x1xf32>
    %57 = vector.extract_strided_slice %32 {offsets = [0, 0], sizes = [8, 255], strides = [1, 1]} : vector<8x256xf32> to vector<8x255xf32>
    %58 = tpu.concatenate %56, %57 in 1 : vector<8x1xf32>, vector<8x255xf32> -> vector<8x256xf32>
    %c3 = arith.constant 3 : index
    %c0_26 = arith.constant 0 : index
    %c0_27 = arith.constant 0 : index
    %59 = vector.load %arg4[%c3, %c0_26, %c0_27] : memref<9x1x256xf32, #tpu.memory_space<vmem>>, vector<1x1x256xf32>
    %60 = vector.shape_cast %59 : vector<1x1x256xf32> to vector<1x256xf32>
    %61 = vector.broadcast %60 : vector<1x256xf32> to vector<8x256xf32>
    %62 = arith.mulf %58, %61 : vector<8x256xf32>
    %c4 = arith.constant 4 : index
    %c0_28 = arith.constant 0 : index
    %c0_29 = arith.constant 0 : index
    %63 = vector.load %arg4[%c4, %c0_28, %c0_29] : memref<9x1x256xf32, #tpu.memory_space<vmem>>, vector<1x1x256xf32>
    %64 = vector.shape_cast %63 : vector<1x1x256xf32> to vector<1x256xf32>
    %65 = vector.broadcast %64 : vector<1x256xf32> to vector<8x256xf32>
    %66 = arith.mulf %32, %65 : vector<8x256xf32>
    %67 = vector.extract_strided_slice %32 {offsets = [0, 1], sizes = [8, 255], strides = [1, 1]} : vector<8x256xf32> to vector<8x255xf32>
    %68 = vector.extract_strided_slice %32 {offsets = [0, 0], sizes = [8, 1], strides = [1, 1]} : vector<8x256xf32> to vector<8x1xf32>
    %69 = tpu.concatenate %67, %68 in 1 : vector<8x255xf32>, vector<8x1xf32> -> vector<8x256xf32>
    %c5 = arith.constant 5 : index
    %c0_30 = arith.constant 0 : index
    %c0_31 = arith.constant 0 : index
    %70 = vector.load %arg4[%c5, %c0_30, %c0_31] : memref<9x1x256xf32, #tpu.memory_space<vmem>>, vector<1x1x256xf32>
    %71 = vector.shape_cast %70 : vector<1x1x256xf32> to vector<1x256xf32>
    %72 = vector.broadcast %71 : vector<1x256xf32> to vector<8x256xf32>
    %73 = arith.mulf %69, %72 : vector<8x256xf32>
    %74 = vector.extract_strided_slice %32 {offsets = [0, 15], sizes = [8, 241], strides = [1, 1]} : vector<8x256xf32> to vector<8x241xf32>
    %75 = vector.extract_strided_slice %32 {offsets = [0, 0], sizes = [8, 15], strides = [1, 1]} : vector<8x256xf32> to vector<8x15xf32>
    %76 = tpu.concatenate %74, %75 in 1 : vector<8x241xf32>, vector<8x15xf32> -> vector<8x256xf32>
    %c6 = arith.constant 6 : index
    %c0_32 = arith.constant 0 : index
    %c0_33 = arith.constant 0 : index
    %77 = vector.load %arg4[%c6, %c0_32, %c0_33] : memref<9x1x256xf32, #tpu.memory_space<vmem>>, vector<1x1x256xf32>
    %78 = vector.shape_cast %77 : vector<1x1x256xf32> to vector<1x256xf32>
    %79 = vector.broadcast %78 : vector<1x256xf32> to vector<8x256xf32>
    %80 = arith.mulf %76, %79 : vector<8x256xf32>
    %81 = vector.extract_strided_slice %32 {offsets = [0, 16], sizes = [8, 240], strides = [1, 1]} : vector<8x256xf32> to vector<8x240xf32>
    %82 = vector.extract_strided_slice %32 {offsets = [0, 0], sizes = [8, 16], strides = [1, 1]} : vector<8x256xf32> to vector<8x16xf32>
    %83 = tpu.concatenate %81, %82 in 1 : vector<8x240xf32>, vector<8x16xf32> -> vector<8x256xf32>
    %c7 = arith.constant 7 : index
    %c0_34 = arith.constant 0 : index
    %c0_35 = arith.constant 0 : index
    %84 = vector.load %arg4[%c7, %c0_34, %c0_35] : memref<9x1x256xf32, #tpu.memory_space<vmem>>, vector<1x1x256xf32>
    %85 = vector.shape_cast %84 : vector<1x1x256xf32> to vector<1x256xf32>
    %86 = vector.broadcast %85 : vector<1x256xf32> to vector<8x256xf32>
    %87 = arith.mulf %83, %86 : vector<8x256xf32>
    %88 = vector.extract_strided_slice %32 {offsets = [0, 17], sizes = [8, 239], strides = [1, 1]} : vector<8x256xf32> to vector<8x239xf32>
    %89 = vector.extract_strided_slice %32 {offsets = [0, 0], sizes = [8, 17], strides = [1, 1]} : vector<8x256xf32> to vector<8x17xf32>
    %90 = tpu.concatenate %88, %89 in 1 : vector<8x239xf32>, vector<8x17xf32> -> vector<8x256xf32>
    %c8 = arith.constant 8 : index
    %c0_36 = arith.constant 0 : index
    %c0_37 = arith.constant 0 : index
    %91 = vector.load %arg4[%c8, %c0_36, %c0_37] : memref<9x1x256xf32, #tpu.memory_space<vmem>>, vector<1x1x256xf32>
    %92 = vector.shape_cast %91 : vector<1x1x256xf32> to vector<1x256xf32>
    %93 = vector.broadcast %92 : vector<1x256xf32> to vector<8x256xf32>
    %94 = arith.mulf %90, %93 : vector<8x256xf32>
    %95 = tpu.concatenate %41, %48, %55, %62, %66, %73, %80, %87, %94 in 0 : vector<8x256xf32>, vector<8x256xf32>, vector<8x256xf32>, vector<8x256xf32>, vector<8x256xf32>, vector<8x256xf32>, vector<8x256xf32>, vector<8x256xf32>, vector<8x256xf32> -> vector<72x256xf32>
    %96 = arith.truncf %95 : vector<72x256xf32> to vector<72x256xbf16>
    %cst_38 = arith.constant dense<0.000000e+00> : vector<8x256xf32>
    %97 = tpu.matmul %33, %96, %cst_38 {dimension_numbers = #tpu.dot_dimension_numbers<[1], [0], [0], [1], [0, 0, 1, 1], [], []>} : vector<8x72xbf16>, vector<72x256xbf16>, vector<8x256xf32> -> vector<8x256xf32>
    %98 = vector.broadcast %34 : vector<8x1xf32> to vector<8x256xf32>
    %99 = arith.addf %97, %98 : vector<8x256xf32>
    %c0_39 = arith.constant 0 : index
    %c0_40 = arith.constant 0 : index
    %100 = vector.load %arg9[%c0_39, %c0_40] : memref<8x1xf32, #tpu.memory_space<vmem>>, vector<8x1xf32>
    %c0_41 = arith.constant 0 : index
    %c0_42 = arith.constant 0 : index
    %101 = vector.load %arg10[%c0_41, %c0_42] : memref<8x1xf32, #tpu.memory_space<vmem>>, vector<8x1xf32>
    %cst_43 = arith.constant dense<0.000000e+00> : vector<8x256xf32>
    %102 = tpu.matmul %2, %99, %cst_43 {dimension_numbers = #tpu.dot_dimension_numbers<[1], [0], [0], [1], [0, 0, 1, 1], [], []>} : vector<8x8xf32>, vector<8x256xf32>, vector<8x256xf32> -> vector<8x256xf32>
    %cst_44 = arith.constant dense<0.000000e+00> : vector<8xf32>
    %103 = vector.multi_reduction <add>, %102, %cst_44 [1] : vector<8x256xf32> to vector<8xf32>
    %104 = vector.shape_cast %103 : vector<8xf32> to vector<8x1xf32>
    %cst_45 = arith.constant 0.001953125 : f32
    %105 = vector.broadcast %cst_45 : f32 to vector<8x1xf32>
    %106 = arith.mulf %104, %105 : vector<8x1xf32>
    %107 = vector.broadcast %106 : vector<8x1xf32> to vector<8x256xf32>
    %108 = arith.subf %99, %107 : vector<8x256xf32>
    %109 = arith.mulf %108, %108 : vector<8x256xf32>
    %cst_46 = arith.constant dense<0.000000e+00> : vector<8x256xf32>
    %110 = tpu.matmul %2, %109, %cst_46 {dimension_numbers = #tpu.dot_dimension_numbers<[1], [0], [0], [1], [0, 0, 1, 1], [], []>} : vector<8x8xf32>, vector<8x256xf32>, vector<8x256xf32> -> vector<8x256xf32>
    %cst_47 = arith.constant dense<0.000000e+00> : vector<8xf32>
    %111 = vector.multi_reduction <add>, %110, %cst_47 [1] : vector<8x256xf32> to vector<8xf32>
    %112 = vector.shape_cast %111 : vector<8xf32> to vector<8x1xf32>
    %cst_48 = arith.constant 0.001953125 : f32
    %113 = vector.broadcast %cst_48 : f32 to vector<8x1xf32>
    %114 = arith.mulf %112, %113 : vector<8x1xf32>
    %cst_49 = arith.constant 9.99999974E-6 : f32
    %115 = vector.broadcast %cst_49 : f32 to vector<8x1xf32>
    %116 = arith.addf %114, %115 : vector<8x1xf32>
    %117 = math.rsqrt %116 : vector<8x1xf32>
    %118 = vector.broadcast %117 : vector<8x1xf32> to vector<8x256xf32>
    %119 = arith.mulf %108, %118 : vector<8x256xf32>
    %120 = vector.broadcast %100 : vector<8x1xf32> to vector<8x256xf32>
    %121 = arith.mulf %119, %120 : vector<8x256xf32>
    %122 = vector.broadcast %101 : vector<8x1xf32> to vector<8x256xf32>
    %123 = arith.addf %121, %122 : vector<8x256xf32>
    %124 = arith.negf %123 : vector<8x256xf32>
    %125 = math.exp %124 : vector<8x256xf32>
    %cst_50 = arith.constant 1.000000e+00 : f32
    %126 = vector.broadcast %cst_50 : f32 to vector<8x256xf32>
    %127 = arith.addf %126, %125 : vector<8x256xf32>
    %128 = arith.divf %126, %127 : vector<8x256xf32>
    %129 = arith.mulf %123, %128 : vector<8x256xf32>
    %c0_51 = arith.constant 0 : index
    %c0_52 = arith.constant 0 : index
    %130 = vector.load %arg11[%c0_51, %c0_52] : memref<8x72xbf16, #tpu.memory_space<vmem>>, vector<8x72xbf16>
    %c0_53 = arith.constant 0 : index
    %c0_54 = arith.constant 0 : index
    %131 = vector.load %arg12[%c0_53, %c0_54] : memref<8x1xf32, #tpu.memory_space<vmem>>, vector<8x1xf32>
    %132 = vector.extract_strided_slice %129 {offsets = [0, 239], sizes = [8, 17], strides = [1, 1]} : vector<8x256xf32> to vector<8x17xf32>
    %133 = vector.extract_strided_slice %129 {offsets = [0, 0], sizes = [8, 239], strides = [1, 1]} : vector<8x256xf32> to vector<8x239xf32>
    %134 = tpu.concatenate %132, %133 in 1 : vector<8x17xf32>, vector<8x239xf32> -> vector<8x256xf32>
    %c0_55 = arith.constant 0 : index
    %c0_56 = arith.constant 0 : index
    %c0_57 = arith.constant 0 : index
    %135 = vector.load %arg4[%c0_55, %c0_56, %c0_57] : memref<9x1x256xf32, #tpu.memory_space<vmem>>, vector<1x1x256xf32>
    %136 = vector.shape_cast %135 : vector<1x1x256xf32> to vector<1x256xf32>
    %137 = vector.broadcast %136 : vector<1x256xf32> to vector<8x256xf32>
    %138 = arith.mulf %134, %137 : vector<8x256xf32>
    %139 = vector.extract_strided_slice %129 {offsets = [0, 240], sizes = [8, 16], strides = [1, 1]} : vector<8x256xf32> to vector<8x16xf32>
    %140 = vector.extract_strided_slice %129 {offsets = [0, 0], sizes = [8, 240], strides = [1, 1]} : vector<8x256xf32> to vector<8x240xf32>
    %141 = tpu.concatenate %139, %140 in 1 : vector<8x16xf32>, vector<8x240xf32> -> vector<8x256xf32>
    %c1_58 = arith.constant 1 : index
    %c0_59 = arith.constant 0 : index
    %c0_60 = arith.constant 0 : index
    %142 = vector.load %arg4[%c1_58, %c0_59, %c0_60] : memref<9x1x256xf32, #tpu.memory_space<vmem>>, vector<1x1x256xf32>
    %143 = vector.shape_cast %142 : vector<1x1x256xf32> to vector<1x256xf32>
    %144 = vector.broadcast %143 : vector<1x256xf32> to vector<8x256xf32>
    %145 = arith.mulf %141, %144 : vector<8x256xf32>
    %146 = vector.extract_strided_slice %129 {offsets = [0, 241], sizes = [8, 15], strides = [1, 1]} : vector<8x256xf32> to vector<8x15xf32>
    %147 = vector.extract_strided_slice %129 {offsets = [0, 0], sizes = [8, 241], strides = [1, 1]} : vector<8x256xf32> to vector<8x241xf32>
    %148 = tpu.concatenate %146, %147 in 1 : vector<8x15xf32>, vector<8x241xf32> -> vector<8x256xf32>
    %c2_61 = arith.constant 2 : index
    %c0_62 = arith.constant 0 : index
    %c0_63 = arith.constant 0 : index
    %149 = vector.load %arg4[%c2_61, %c0_62, %c0_63] : memref<9x1x256xf32, #tpu.memory_space<vmem>>, vector<1x1x256xf32>
    %150 = vector.shape_cast %149 : vector<1x1x256xf32> to vector<1x256xf32>
    %151 = vector.broadcast %150 : vector<1x256xf32> to vector<8x256xf32>
    %152 = arith.mulf %148, %151 : vector<8x256xf32>
    %153 = vector.extract_strided_slice %129 {offsets = [0, 255], sizes = [8, 1], strides = [1, 1]} : vector<8x256xf32> to vector<8x1xf32>
    %154 = vector.extract_strided_slice %129 {offsets = [0, 0], sizes = [8, 255], strides = [1, 1]} : vector<8x256xf32> to vector<8x255xf32>
    %155 = tpu.concatenate %153, %154 in 1 : vector<8x1xf32>, vector<8x255xf32> -> vector<8x256xf32>
    %c3_64 = arith.constant 3 : index
    %c0_65 = arith.constant 0 : index
    %c0_66 = arith.constant 0 : index
    %156 = vector.load %arg4[%c3_64, %c0_65, %c0_66] : memref<9x1x256xf32, #tpu.memory_space<vmem>>, vector<1x1x256xf32>
    %157 = vector.shape_cast %156 : vector<1x1x256xf32> to vector<1x256xf32>
    %158 = vector.broadcast %157 : vector<1x256xf32> to vector<8x256xf32>
    %159 = arith.mulf %155, %158 : vector<8x256xf32>
    %c4_67 = arith.constant 4 : index
    %c0_68 = arith.constant 0 : index
    %c0_69 = arith.constant 0 : index
    %160 = vector.load %arg4[%c4_67, %c0_68, %c0_69] : memref<9x1x256xf32, #tpu.memory_space<vmem>>, vector<1x1x256xf32>
    %161 = vector.shape_cast %160 : vector<1x1x256xf32> to vector<1x256xf32>
    %162 = vector.broadcast %161 : vector<1x256xf32> to vector<8x256xf32>
    %163 = arith.mulf %129, %162 : vector<8x256xf32>
    %164 = vector.extract_strided_slice %129 {offsets = [0, 1], sizes = [8, 255], strides = [1, 1]} : vector<8x256xf32> to vector<8x255xf32>
    %165 = vector.extract_strided_slice %129 {offsets = [0, 0], sizes = [8, 1], strides = [1, 1]} : vector<8x256xf32> to vector<8x1xf32>
    %166 = tpu.concatenate %164, %165 in 1 : vector<8x255xf32>, vector<8x1xf32> -> vector<8x256xf32>
    %c5_70 = arith.constant 5 : index
    %c0_71 = arith.constant 0 : index
    %c0_72 = arith.constant 0 : index
    %167 = vector.load %arg4[%c5_70, %c0_71, %c0_72] : memref<9x1x256xf32, #tpu.memory_space<vmem>>, vector<1x1x256xf32>
    %168 = vector.shape_cast %167 : vector<1x1x256xf32> to vector<1x256xf32>
    %169 = vector.broadcast %168 : vector<1x256xf32> to vector<8x256xf32>
    %170 = arith.mulf %166, %169 : vector<8x256xf32>
    %171 = vector.extract_strided_slice %129 {offsets = [0, 15], sizes = [8, 241], strides = [1, 1]} : vector<8x256xf32> to vector<8x241xf32>
    %172 = vector.extract_strided_slice %129 {offsets = [0, 0], sizes = [8, 15], strides = [1, 1]} : vector<8x256xf32> to vector<8x15xf32>
    %173 = tpu.concatenate %171, %172 in 1 : vector<8x241xf32>, vector<8x15xf32> -> vector<8x256xf32>
    %c6_73 = arith.constant 6 : index
    %c0_74 = arith.constant 0 : index
    %c0_75 = arith.constant 0 : index
    %174 = vector.load %arg4[%c6_73, %c0_74, %c0_75] : memref<9x1x256xf32, #tpu.memory_space<vmem>>, vector<1x1x256xf32>
    %175 = vector.shape_cast %174 : vector<1x1x256xf32> to vector<1x256xf32>
    %176 = vector.broadcast %175 : vector<1x256xf32> to vector<8x256xf32>
    %177 = arith.mulf %173, %176 : vector<8x256xf32>
    %178 = vector.extract_strided_slice %129 {offsets = [0, 16], sizes = [8, 240], strides = [1, 1]} : vector<8x256xf32> to vector<8x240xf32>
    %179 = vector.extract_strided_slice %129 {offsets = [0, 0], sizes = [8, 16], strides = [1, 1]} : vector<8x256xf32> to vector<8x16xf32>
    %180 = tpu.concatenate %178, %179 in 1 : vector<8x240xf32>, vector<8x16xf32> -> vector<8x256xf32>
    %c7_76 = arith.constant 7 : index
    %c0_77 = arith.constant 0 : index
    %c0_78 = arith.constant 0 : index
    %181 = vector.load %arg4[%c7_76, %c0_77, %c0_78] : memref<9x1x256xf32, #tpu.memory_space<vmem>>, vector<1x1x256xf32>
    %182 = vector.shape_cast %181 : vector<1x1x256xf32> to vector<1x256xf32>
    %183 = vector.broadcast %182 : vector<1x256xf32> to vector<8x256xf32>
    %184 = arith.mulf %180, %183 : vector<8x256xf32>
    %185 = vector.extract_strided_slice %129 {offsets = [0, 17], sizes = [8, 239], strides = [1, 1]} : vector<8x256xf32> to vector<8x239xf32>
    %186 = vector.extract_strided_slice %129 {offsets = [0, 0], sizes = [8, 17], strides = [1, 1]} : vector<8x256xf32> to vector<8x17xf32>
    %187 = tpu.concatenate %185, %186 in 1 : vector<8x239xf32>, vector<8x17xf32> -> vector<8x256xf32>
    %c8_79 = arith.constant 8 : index
    %c0_80 = arith.constant 0 : index
    %c0_81 = arith.constant 0 : index
    %188 = vector.load %arg4[%c8_79, %c0_80, %c0_81] : memref<9x1x256xf32, #tpu.memory_space<vmem>>, vector<1x1x256xf32>
    %189 = vector.shape_cast %188 : vector<1x1x256xf32> to vector<1x256xf32>
    %190 = vector.broadcast %189 : vector<1x256xf32> to vector<8x256xf32>
    %191 = arith.mulf %187, %190 : vector<8x256xf32>
    %192 = tpu.concatenate %138, %145, %152, %159, %163, %170, %177, %184, %191 in 0 : vector<8x256xf32>, vector<8x256xf32>, vector<8x256xf32>, vector<8x256xf32>, vector<8x256xf32>, vector<8x256xf32>, vector<8x256xf32>, vector<8x256xf32>, vector<8x256xf32> -> vector<72x256xf32>
    %193 = arith.truncf %192 : vector<72x256xf32> to vector<72x256xbf16>
    %cst_82 = arith.constant dense<0.000000e+00> : vector<8x256xf32>
    %194 = tpu.matmul %130, %193, %cst_82 {dimension_numbers = #tpu.dot_dimension_numbers<[1], [0], [0], [1], [0, 0, 1, 1], [], []>} : vector<8x72xbf16>, vector<72x256xbf16>, vector<8x256xf32> -> vector<8x256xf32>
    %195 = vector.broadcast %131 : vector<8x1xf32> to vector<8x256xf32>
    %196 = arith.addf %194, %195 : vector<8x256xf32>
    %197 = arith.addf %1, %196 : vector<8x256xf32>
    %c0_83 = arith.constant 0 : index
    %c0_84 = arith.constant 0 : index
    %c0_85 = arith.constant 0 : index
    %198 = vector.load %arg2[%c0_83, %c0_84, %c0_85] : memref<1x8x256xf32, #tpu.memory_space<vmem>>, vector<1x8x256xf32>
    %199 = vector.shape_cast %198 : vector<1x8x256xf32> to vector<8x256xf32>
    %200 = arith.addf %197, %199 : vector<8x256xf32>
    %c0_86 = arith.constant 0 : index
    %c0_87 = arith.constant 0 : index
    %c0_88 = arith.constant 0 : index
    %201 = vector.load %arg13[%c0_86, %c0_87, %c0_88] : memref<1x8x256xf32, #tpu.memory_space<vmem>>, vector<1x8x256xf32>
    %202 = vector.shape_cast %201 : vector<1x8x256xf32> to vector<8x256xf32>
    %203 = vector.shape_cast %200 : vector<8x256xf32> to vector<1x8x256xf32>
    tpu.vector_store %arg13[%c0_86, %c0_87, %c0_88], %203 {strides = array<i32>} : memref<1x8x256xf32, #tpu.memory_space<vmem>>, vector<1x8x256xf32>,
    return
  }
  func.func @transform_0(%arg0: i32) -> (i32, i32, i32) {
    %c0_i32 = arith.constant 0 : i32
    %c0_i32_0 = arith.constant 0 : i32
    %c0_i32_1 = arith.constant 0 : i32
    return %arg0, %c0_i32, %c0_i32_0 : i32, i32, i32
  }
  func.func @transform_1(%arg0: i32) -> (i32, i32, i32) {
    %c0_i32 = arith.constant 0 : i32
    %c0_i32_0 = arith.constant 0 : i32
    %c0_i32_1 = arith.constant 0 : i32
    return %arg0, %c0_i32, %c0_i32_0 : i32, i32, i32
  }
  func.func @transform_2(%arg0: i32) -> (i32, i32) {
    %c0_i32 = arith.constant 0 : i32
    %c0_i32_0 = arith.constant 0 : i32
    %c0_i32_1 = arith.constant 0 : i32
    return %c0_i32, %c0_i32_0 : i32, i32
  }
  func.func @transform_3(%arg0: i32) -> (i32, i32, i32) {
    %c0_i32 = arith.constant 0 : i32
    %c0_i32_0 = arith.constant 0 : i32
    %c0_i32_1 = arith.constant 0 : i32
    %c0_i32_2 = arith.constant 0 : i32
    return %c0_i32, %c0_i32_0, %c0_i32_1 : i32, i32, i32
  }
  func.func @transform_4(%arg0: i32) -> (i32, i32) {
    %c0_i32 = arith.constant 0 : i32
    %c0_i32_0 = arith.constant 0 : i32
    %c0_i32_1 = arith.constant 0 : i32
    return %c0_i32, %c0_i32_0 : i32, i32
  }
  func.func @transform_5(%arg0: i32) -> (i32, i32) {
    %c0_i32 = arith.constant 0 : i32
    %c0_i32_0 = arith.constant 0 : i32
    %c0_i32_1 = arith.constant 0 : i32
    return %c0_i32, %c0_i32_0 : i32, i32
  }
  func.func @transform_6(%arg0: i32) -> (i32, i32) {
    %c0_i32 = arith.constant 0 : i32
    %c0_i32_0 = arith.constant 0 : i32
    %c0_i32_1 = arith.constant 0 : i32
    return %c0_i32, %c0_i32_0 : i32, i32
  }
  func.func @transform_7(%arg0: i32) -> (i32, i32) {
    %c0_i32 = arith.constant 0 : i32
    %c0_i32_0 = arith.constant 0 : i32
    %c0_i32_1 = arith.constant 0 : i32
    return %c0_i32, %c0_i32_0 : i32, i32
  }
  func.func @transform_8(%arg0: i32) -> (i32, i32) {
    %c0_i32 = arith.constant 0 : i32
    %c0_i32_0 = arith.constant 0 : i32
    %c0_i32_1 = arith.constant 0 : i32
    return %c0_i32, %c0_i32_0 : i32, i32
  }
  func.func @transform_9(%arg0: i32) -> (i32, i32) {
    %c0_i32 = arith.constant 0 : i32
    %c0_i32_0 = arith.constant 0 : i32
    %c0_i32_1 = arith.constant 0 : i32
    return %c0_i32, %c0_i32_0 : i32, i32
  }
  func.func @transform_10(%arg0: i32) -> (i32, i32) {
    %c0_i32 = arith.constant 0 : i32
    %c0_i32_0 = arith.constant 0 : i32
    %c0_i32_1 = arith.constant 0 : i32
    return %c0_i32, %c0_i32_0 : i32, i32
  }
  func.func @transform_11(%arg0: i32) -> (i32, i32) {
    %c0_i32 = arith.constant 0 : i32
    %c0_i32_0 = arith.constant 0 : i32
    %c0_i32_1 = arith.constant 0 : i32
    return %c0_i32, %c0_i32_0 : i32, i32
  }
  func.func @transform_12(%arg0: i32) -> (i32, i32, i32) {
    %c0_i32 = arith.constant 0 : i32
    %c0_i32_0 = arith.constant 0 : i32
    %c0_i32_1 = arith.constant 0 : i32
    return %arg0, %c0_i32, %c0_i32_0 : i32, i32, i32
  }
}

</mosaic_0001>

<llo_original>
// kernel: mid_block_wrapper_forward.1
$region0: #{mid_block_wrapper_forward.1}
  #allocation0 [shape = 'u32[]', space=smem, size = 0x4, offset = 0x4, fixed_abs, tag = 'smem constant byte address 0x4 - core index']
  #allocation1 [shape = 'u32[144,128]{1,0:T(1,128)}', space=vmem, size = 0x12000, scoped, tag = 'internal scratch']
  %s0 = inlined_call_operand.vmem [shape: f32[2,8,256], index: 0, kind: input, shape index: {}]
  %s1 = inlined_call_operand.vmem [shape: f32[2,8,256], index: 1, kind: input, shape index: {}]
  %s2 = inlined_call_operand.vmem [shape: f32[8,8], index: 2, kind: input, shape index: {}]
  %s3 = inlined_call_operand.vmem [shape: f32[9,1,256], index: 3, kind: input, shape index: {}]
  %s4 = inlined_call_operand.vmem [shape: f32[8,1], index: 4, kind: input, shape index: {}]
  %s5 = inlined_call_operand.vmem [shape: f32[8,1], index: 5, kind: input, shape index: {}]
  %s6 = inlined_call_operand.vmem [shape: bf16[8,72], index: 6, kind: input, shape index: {}]
  %s7 = inlined_call_operand.vmem [shape: f32[8,1], index: 7, kind: input, shape index: {}]
  %s8 = inlined_call_operand.vmem [shape: f32[8,1], index: 8, kind: input, shape index: {}]
  %s9 = inlined_call_operand.vmem [shape: f32[8,1], index: 9, kind: input, shape index: {}]
  %s10 = inlined_call_operand.vmem [shape: bf16[8,72], index: 10, kind: input, shape index: {}]
  %s11 = inlined_call_operand.vmem [shape: f32[8,1], index: 11, kind: input, shape index: {}]
  %s12 = inlined_call_operand.vmem [shape: f32[2,8,256], index: 12, kind: output, shape index: {}]
  %s13 = sld [smem:[#allocation0]]
  $region81: #{mid_block_wrapper_forward.1} parent=0
    _
  %s15 = ssub.s32 1, %s13
  %s16 = scalar_select 0, %s15, %s13
  loop: start=0, step=1, limit=4
  $region2: #{mid_block_wrapper_forward.1} parent=0 // loop_pre_header
    _
  $region3: #{mid_block_wrapper_forward.1} parent=0 // loop_header
    %s18 = sphi 0, %s22
    %p19 = scmp.ge.s32.totalorder %s18, 4
    %s28 = sphi 0, %s30
    %s31 = sphi 0, %s28
    %s32 = sphi 0, %s31
    %s48 = sphi 0, %s32
    %s54 = sphi 0, %s56
    %s57 = sphi 0, %s54
    %s58 = sphi 0, %s57
    %s74 = sphi 0, %s58
    %s78 = sphi 0, %s78
    %s80 = sphi 0, %s78
    %s81 = sphi 0, %s80
    %s95 = sphi 0, %s81
    %s99 = sphi 0, %s99
    %s101 = sphi 0, %s99
    %s102 = sphi 0, %s101
    %s116 = sphi 0, %s102
    %s120 = sphi 0, %s120
    %s122 = sphi 0, %s120
    %s123 = sphi 0, %s122
    %s137 = sphi 0, %s123
    %s141 = sphi 0, %s141
    %s143 = sphi 0, %s141
    %s144 = sphi 0, %s143
    %s158 = sphi 0, %s144
    %s162 = sphi 0, %s162
    %s164 = sphi 0, %s162
    %s165 = sphi 0, %s164
    %s179 = sphi 0, %s165
    %s183 = sphi 0, %s183
    %s185 = sphi 0, %s183
    %s186 = sphi 0, %s185
    %s200 = sphi 0, %s186
    %s204 = sphi 0, %s204
    %s206 = sphi 0, %s204
    %s207 = sphi 0, %s206
    %s221 = sphi 0, %s207
    %s225 = sphi 0, %s225
    %s227 = sphi 0, %s225
    %s228 = sphi 0, %s227
    %s242 = sphi 0, %s228
    %s246 = sphi 0, %s246
    %s248 = sphi 0, %s246
    %s249 = sphi 0, %s248
    %s263 = sphi 0, %s249
    %s267 = sphi 0, %s267
    %s269 = sphi 0, %s267
    %s270 = sphi 0, %s269
    %s284 = sphi 0, %s270
    %s290 = sphi 0, %s292
    %s293 = sphi 0, %s290
    %s294 = sphi 0, %s293
    %s310 = sphi 0, %s294
  $region4: #{mid_block_wrapper_forward.1} parent=0 // loop_header_branch
    %21 = sbr.rel (%p19) target = $region8
  $region5: #{mid_block_wrapper_forward.1} parent=0 // loop_body
    %s23 = ssub.s32 %s18, 1
    %s24 = ssub.s32 %s18, 2
    %s25 = sadd.s32 %s18, 1
    %s26 = ssub.s32 %s18, %s25
    %p27 = scmp.eq.s32.totalorder %s26, 0
    %s29 = sadd.s32 %s28, 1
    %s30 = scalar_select %p27, %s28, %s29
    %p33 = pneg %p27
    %p34 = scmp.eq.s32.totalorder %s18, 1
    %p35 = por %p33, %p34
    %p36 = scmp.ne.s32.totalorder %s28, %s31
    %p37 = scmp.eq.s32.totalorder %s18, 0
    %p38 = por %p36, %p37
    %p39 = scmp.ne.s32.totalorder %s28, %s31
    %p40 = scmp.eq.s32.totalorder %s23, 1
    %p41 = por %p39, %p40
    %p42 = scmp.ne.s32.totalorder %s31, %s32
    %p43 = scmp.eq.s32.totalorder %s23, 0
    %p44 = por %p42, %p43
    %p45 = scmp.ne.s32.totalorder %s31, %s32
    %p46 = scmp.eq.s32.totalorder %s24, 1
    %p47 = por %p45, %p46
    %p49 = scmp.ne.s32.totalorder %s32, %s48
    %p50 = scmp.eq.s32.totalorder %s24, 0
    %p51 = por %p49, %p50
    %s52 = ssub.s32 %s18, %s25
    %p53 = scmp.eq.s32.totalorder %s52, 0
    %s55 = sadd.s32 %s54, 1
    %s56 = scalar_select %p53, %s54, %s55
    %p59 = pneg %p53
    %p60 = scmp.eq.s32.totalorder %s18, 1
    %p61 = por %p59, %p60
    %p62 = scmp.ne.s32.totalorder %s54, %s57
    %p63 = scmp.eq.s32.totalorder %s18, 0
    %p64 = por %p62, %p63
    %p65 = scmp.ne.s32.totalorder %s54, %s57
    %p66 = scmp.eq.s32.totalorder %s23, 1
    %p67 = por %p65, %p66
    %p68 = scmp.ne.s32.totalorder %s57, %s58
    %p69 = scmp.eq.s32.totalorder %s23, 0
    %p70 = por %p68, %p69
    %p71 = scmp.ne.s32.totalorder %s57, %s58
    %p72 = scmp.eq.s32.totalorder %s24, 1
    %p73 = por %p71, %p72
    %p75 = scmp.ne.s32.totalorder %s58, %s74
    %p76 = scmp.eq.s32.totalorder %s24, 0
    %p77 = por %p75, %p76
    %s79 = sadd.s32 %s78, 1
    %p82 = scmp.eq.s32.totalorder %s18, 1
    %p83 = scmp.ne.s32.totalorder %s78, %s80
    %p84 = scmp.eq.s32.totalorder %s18, 0
    %p85 = por %p83, %p84
    %p86 = scmp.ne.s32.totalorder %s78, %s80
    %p87 = scmp.eq.s32.totalorder %s23, 1
    %p88 = por %p86, %p87
    %p89 = scmp.ne.s32.totalorder %s80, %s81
    %p90 = scmp.eq.s32.totalorder %s23, 0
    %p91 = por %p89, %p90
    %p92 = scmp.ne.s32.totalorder %s80, %s81
    %p93 = scmp.eq.s32.totalorder %s24, 1
    %p94 = por %p92, %p93
    %p96 = scmp.ne.s32.totalorder %s81, %s95
    %p97 = scmp.eq.s32.totalorder %s24, 0
    %p98 = por %p96, %p97
    %s100 = sadd.s32 %s99, 1
    %p103 = scmp.eq.s32.totalorder %s18, 1
    %p104 = scmp.ne.s32.totalorder %s99, %s101
    %p105 = scmp.eq.s32.totalorder %s18, 0
    %p106 = por %p104, %p105
    %p107 = scmp.ne.s32.totalorder %s99, %s101
    %p108 = scmp.eq.s32.totalorder %s23, 1
    %p109 = por %p107, %p108
    %p110 = scmp.ne.s32.totalorder %s101, %s102
    %p111 = scmp.eq.s32.totalorder %s23, 0
    %p112 = por %p110, %p111
    %p113 = scmp.ne.s32.totalorder %s101, %s102
    %p114 = scmp.eq.s32.totalorder %s24, 1
    %p115 = por %p113, %p114
    %p117 = scmp.ne.s32.totalorder %s102, %s116
    %p118 = scmp.eq.s32.totalorder %s24, 0
    %p119 = por %p117, %p118
    %s121 = sadd.s32 %s120, 1
    %p124 = scmp.eq.s32.totalorder %s18, 1
    %p125 = scmp.ne.s32.totalorder %s120, %s122
    %p126 = scmp.eq.s32.totalorder %s18, 0
    %p127 = por %p125, %p126
    %p128 = scmp.ne.s32.totalorder %s120, %s122
    %p129 = scmp.eq.s32.totalorder %s23, 1
    %p130 = por %p128, %p129
    %p131 = scmp.ne.s32.totalorder %s122, %s123
    %p132 = scmp.eq.s32.totalorder %s23, 0
    %p133 = por %p131, %p132
    %p134 = scmp.ne.s32.totalorder %s122, %s123
    %p135 = scmp.eq.s32.totalorder %s24, 1
    %p136 = por %p134, %p135
    %p138 = scmp.ne.s32.totalorder %s123, %s137
    %p139 = scmp.eq.s32.totalorder %s24, 0
    %p140 = por %p138, %p139
    %s142 = sadd.s32 %s141, 1
    %p145 = scmp.eq.s32.totalorder %s18, 1
    %p146 = scmp.ne.s32.totalorder %s141, %s143
    %p147 = scmp.eq.s32.totalorder %s18, 0
    %p148 = por %p146, %p147
    %p149 = scmp.ne.s32.totalorder %s141, %s143
    %p150 = scmp.eq.s32.totalorder %s23, 1
    %p151 = por %p149, %p150
    %p152 = scmp.ne.s32.totalorder %s143, %s144
    %p153 = scmp.eq.s32.totalorder %s23, 0
    %p154 = por %p152, %p153
    %p155 = scmp.ne.s32.totalorder %s143, %s144
    %p156 = scmp.eq.s32.totalorder %s24, 1
    %p157 = por %p155, %p156
    %p159 = scmp.ne.s32.totalorder %s144, %s158
    %p160 = scmp.eq.s32.totalorder %s24, 0
    %p161 = por %p159, %p160
    %s163 = sadd.s32 %s162, 1
    %p166 = scmp.eq.s32.totalorder %s18, 1
    %p167 = scmp.ne.s32.totalorder %s162, %s164
    %p168 = scmp.eq.s32.totalorder %s18, 0
    %p169 = por %p167, %p168
    %p170 = scmp.ne.s32.totalorder %s162, %s164
    %p171 = scmp.eq.s32.totalorder %s23, 1
    %p172 = por %p170, %p171
    %p173 = scmp.ne.s32.totalorder %s164, %s165
    %p174 = scmp.eq.s32.totalorder %s23, 0
    %p175 = por %p173, %p174
    %p176 = scmp.ne.s32.totalorder %s164, %s165
    %p177 = scmp.eq.s32.totalorder %s24, 1
    %p178 = por %p176, %p177
    %p180 = scmp.ne.s32.totalorder %s165, %s179
    %p181 = scmp.eq.s32.totalorder %s24, 0
    %p182 = por %p180, %p181
    %s184 = sadd.s32 %s183, 1
    %p187 = scmp.eq.s32.totalorder %s18, 1
    %p188 = scmp.ne.s32.totalorder %s183, %s185
    %p189 = scmp.eq.s32.totalorder %s18, 0
    %p190 = por %p188, %p189
    %p191 = scmp.ne.s32.totalorder %s183, %s185
    %p192 = scmp.eq.s32.totalorder %s23, 1
    %p193 = por %p191, %p192
    %p194 = scmp.ne.s32.totalorder %s185, %s186
    %p195 = scmp.eq.s32.totalorder %s23, 0
    %p196 = por %p194, %p195
    %p197 = scmp.ne.s32.totalorder %s185, %s186
    %p198 = scmp.eq.s32.totalorder %s24, 1
    %p199 = por %p197, %p198
    %p201 = scmp.ne.s32.totalorder %s186, %s200
    %p202 = scmp.eq.s32.totalorder %s24, 0
    %p203 = por %p201, %p202
    %s205 = sadd.s32 %s204, 1
    %p208 = scmp.eq.s32.totalorder %s18, 1
    %p209 = scmp.ne.s32.totalorder %s204, %s206
    %p210 = scmp.eq.s32.totalorder %s18, 0
    %p211 = por %p209, %p210
    %p212 = scmp.ne.s32.totalorder %s204, %s206
    %p213 = scmp.eq.s32.totalorder %s23, 1
    %p214 = por %p212, %p213
    %p215 = scmp.ne.s32.totalorder %s206, %s207
    %p216 = scmp.eq.s32.totalorder %s23, 0
    %p217 = por %p215, %p216
    %p218 = scmp.ne.s32.totalorder %s206, %s207
    %p219 = scmp.eq.s32.totalorder %s24, 1
    %p220 = por %p218, %p219
    %p222 = scmp.ne.s32.totalorder %s207, %s221
    %p223 = scmp.eq.s32.totalorder %s24, 0
    %p224 = por %p222, %p223
    %s226 = sadd.s32 %s225, 1
    %p229 = scmp.eq.s32.totalorder %s18, 1
    %p230 = scmp.ne.s32.totalorder %s225, %s227
    %p231 = scmp.eq.s32.totalorder %s18, 0
    %p232 = por %p230, %p231
    %p233 = scmp.ne.s32.totalorder %s225, %s227
    %p234 = scmp.eq.s32.totalorder %s23, 1
    %p235 = por %p233, %p234
    %p236 = scmp.ne.s32.totalorder %s227, %s228
    %p237 = scmp.eq.s32.totalorder %s23, 0
    %p238 = por %p236, %p237
    %p239 = scmp.ne.s32.totalorder %s227, %s228
    %p240 = scmp.eq.s32.totalorder %s24, 1
    %p241 = por %p239, %p240
    %p243 = scmp.ne.s32.totalorder %s228, %s242
    %p244 = scmp.eq.s32.totalorder %s24, 0
    %p245 = por %p243, %p244
    %s247 = sadd.s32 %s246, 1
    %p250 = scmp.eq.s32.totalorder %s18, 1
    %p251 = scmp.ne.s32.totalorder %s246, %s248
    %p252 = scmp.eq.s32.totalorder %s18, 0
    %p253 = por %p251, %p252
    %p254 = scmp.ne.s32.totalorder %s246, %s248
    %p255 = scmp.eq.s32.totalorder %s23, 1
    %p256 = por %p254, %p255
    %p257 = scmp.ne.s32.totalorder %s248, %s249
    %p258 = scmp.eq.s32.totalorder %s23, 0
    %p259 = por %p257, %p258
    %p260 = scmp.ne.s32.totalorder %s248, %s249
    %p261 = scmp.eq.s32.totalorder %s24, 1
    %p262 = por %p260, %p261
    %p264 = scmp.ne.s32.totalorder %s249, %s263
    %p265 = scmp.eq.s32.totalorder %s24, 0
    %p266 = por %p264, %p265
    %s268 = sadd.s32 %s267, 1
    %p271 = scmp.eq.s32.totalorder %s18, 1
    %p272 = scmp.ne.s32.totalorder %s267, %s269
    %p273 = scmp.eq.s32.totalorder %s18, 0
    %p274 = por %p272, %p273
    %p275 = scmp.ne.s32.totalorder %s267, %s269
    %p276 = scmp.eq.s32.totalorder %s23, 1
    %p277 = por %p275, %p276
    %p278 = scmp.ne.s32.totalorder %s269, %s270
    %p279 = scmp.eq.s32.totalorder %s23, 0
    %p280 = por %p278, %p279
    %p281 = scmp.ne.s32.totalorder %s269, %s270
    %p282 = scmp.eq.s32.totalorder %s24, 1
    %p283 = por %p281, %p282
    %p285 = scmp.ne.s32.totalorder %s270, %s284
    %p286 = scmp.eq.s32.totalorder %s24, 0
    %p287 = por %p285, %p286
    %s288 = ssub.s32 %s18, %s25
    %p289 = scmp.eq.s32.totalorder %s288, 0
    %s291 = sadd.s32 %s290, 1
    %s292 = scalar_select %p289, %s290, %s291
    %p295 = pneg %p289
    %p296 = scmp.eq.s32.totalorder %s18, 1
    %p297 = por %p295, %p296
    %p298 = scmp.ne.s32.totalorder %s290, %s293
    %p299 = scmp.eq.s32.totalorder %s18, 0
    %p300 = por %p298, %p299
    %p301 = scmp.ne.s32.totalorder %s290, %s293
    %p302 = scmp.eq.s32.totalorder %s23, 1
    %p303 = por %p301, %p302
    %p304 = scmp.ne.s32.totalorder %s293, %s294
    %p305 = scmp.eq.s32.totalorder %s23, 0
    %p306 = por %p304, %p305
    %p307 = scmp.ne.s32.totalorder %s293, %s294
    %p308 = scmp.eq.s32.totalorder %s24, 1
    %p309 = por %p307, %p308
    %p311 = scmp.ne.s32.totalorder %s294, %s310
    %p312 = scmp.eq.s32.totalorder %s24, 0
    %p313 = por %p311, %p312
    %p314 = scmp.le.s32.totalorder 1, %s18
    %p315 = scmp.lt.s32.totalorder %s18, 3
    %p316 = pnand %p314, %p315
    %p317 = pneg %p316
    // Predicated region
    $region9: #{mid_block_wrapper_forward.1} parent=5 // pred_check
      _
    $region10: #{mid_block_wrapper_forward.1} parent=5 // pred_check_branch
      %319 = sbr.rel (%p316) target = $region12
    $region11: #{mid_block_wrapper_forward.1} parent=5 // pred_region
      %s320 = ssub.s32 %s18, 1
      // Predicated region
      $region13: #{mid_block_wrapper_forward.1} parent=11 // pred_check
        %p321 = pneg %p91
      $region14: #{mid_block_wrapper_forward.1} parent=11 // pred_check_branch
        %323 = sbr.rel (%p321) target = $region16
      $region15: #{mid_block_wrapper_forward.1} parent=11 // pred_region
        _
      $region16: #{mid_block_wrapper_forward.1} parent=11 // pred_fallthru
        _
      // Predicated region
      $region17: #{mid_block_wrapper_forward.1} parent=11 // pred_check
        %p324 = pneg %p112
      $region18: #{mid_block_wrapper_forward.1} parent=11 // pred_check_branch
        %326 = sbr.rel (%p324) target = $region20
      $region19: #{mid_block_wrapper_forward.1} parent=11 // pred_region
        _
      $region20: #{mid_block_wrapper_forward.1} parent=11 // pred_fallthru
        _
      // Predicated region
      $region21: #{mid_block_wrapper_forward.1} parent=11 // pred_check
        %p327 = pneg %p133
      $region22: #{mid_block_wrapper_forward.1} parent=11 // pred_check_branch
        %329 = sbr.rel (%p327) target = $region24
      $region23: #{mid_block_wrapper_forward.1} parent=11 // pred_region
        _
      $region24: #{mid_block_wrapper_forward.1} parent=11 // pred_fallthru
        _
      // Predicated region
      $region25: #{mid_block_wrapper_forward.1} parent=11 // pred_check
        %p330 = pneg %p154
      $region26: #{mid_block_wrapper_forward.1} parent=11 // pred_check_branch
        %332 = sbr.rel (%p330) target = $region28
      $region27: #{mid_block_wrapper_forward.1} parent=11 // pred_region
        _
      $region28: #{mid_block_wrapper_forward.1} parent=11 // pred_fallthru
        _
      // Predicated region
      $region29: #{mid_block_wrapper_forward.1} parent=11 // pred_check
        %p333 = pneg %p175
      $region30: #{mid_block_wrapper_forward.1} parent=11 // pred_check_branch
        %335 = sbr.rel (%p333) target = $region32
      $region31: #{mid_block_wrapper_forward.1} parent=11 // pred_region
        _
      $region32: #{mid_block_wrapper_forward.1} parent=11 // pred_fallthru
        _
      // Predicated region
      $region33: #{mid_block_wrapper_forward.1} parent=11 // pred_check
        %p336 = pneg %p196
      $region34: #{mid_block_wrapper_forward.1} parent=11 // pred_check_branch
        %338 = sbr.rel (%p336) target = $region36
      $region35: #{mid_block_wrapper_forward.1} parent=11 // pred_region
        _
      $region36: #{mid_block_wrapper_forward.1} parent=11 // pred_fallthru
        _
      // Predicated region
      $region37: #{mid_block_wrapper_forward.1} parent=11 // pred_check
        %p339 = pneg %p217
      $region38: #{mid_block_wrapper_forward.1} parent=11 // pred_check_branch
        %341 = sbr.rel (%p339) target = $region40
      $region39: #{mid_block_wrapper_forward.1} parent=11 // pred_region
        _
      $region40: #{mid_block_wrapper_forward.1} parent=11 // pred_fallthru
        _
      // Predicated region
      $region41: #{mid_block_wrapper_forward.1} parent=11 // pred_check
        %p342 = pneg %p238
      $region42: #{mid_block_wrapper_forward.1} parent=11 // pred_check_branch
        %344 = sbr.rel (%p342) target = $region44
      $region43: #{mid_block_wrapper_forward.1} parent=11 // pred_region
        _
      $region44: #{mid_block_wrapper_forward.1} parent=11 // pred_fallthru
        _
      // Predicated region
      $region45: #{mid_block_wrapper_forward.1} parent=11 // pred_check
        %p345 = pneg %p259
      $region46: #{mid_block_wrapper_forward.1} parent=11 // pred_check_branch
        %347 = sbr.rel (%p345) target = $region48
      $region47: #{mid_block_wrapper_forward.1} parent=11 // pred_region
        _
      $region48: #{mid_block_wrapper_forward.1} parent=11 // pred_fallthru
        _
      // Predicated region
      $region49: #{mid_block_wrapper_forward.1} parent=11 // pred_check
        %p348 = pneg %p280
      $region50: #{mid_block_wrapper_forward.1} parent=11 // pred_check_branch
        %350 = sbr.rel (%p348) target = $region52
      $region51: #{mid_block_wrapper_forward.1} parent=11 // pred_region
        _
      $region52: #{mid_block_wrapper_forward.1} parent=11 // pred_fallthru
        _
    $region12: #{mid_block_wrapper_forward.1} parent=5 // pred_fallthru
      _
    %p351 = scmp.lt.s32.totalorder %s18, 2
    // Predicated region
    $region53: #{mid_block_wrapper_forward.1} parent=5 // pred_check
      %p352 = pneg %p351
    $region54: #{mid_block_wrapper_forward.1} parent=5 // pred_check_branch
      %354 = sbr.rel (%p352) target = $region56
    $region55: #{mid_block_wrapper_forward.1} parent=5 // pred_region
      // Predicated region
      $region57: #{mid_block_wrapper_forward.1} parent=55 // pred_check
        %p355 = pneg %p38
      $region58: #{mid_block_wrapper_forward.1} parent=55 // pred_check_branch
        %357 = sbr.rel (%p355) target = $region60
      $region59: #{mid_block_wrapper_forward.1} parent=55 // pred_region
        %p358 = scmp.lt.s32.totalorder %s18, 1
        %s359 = scalar_select %p358, %s18, 1
        %s360 = smul.addr %s359, 2
        %s361 = smul.addr %s360, 8
        %s362 = scalar_lea.vmem %s0, %s361
      $region60: #{mid_block_wrapper_forward.1} parent=55 // pred_fallthru
        _
      // Predicated region
      $region61: #{mid_block_wrapper_forward.1} parent=55 // pred_check
        %p363 = pneg %p64
      $region62: #{mid_block_wrapper_forward.1} parent=55 // pred_check_branch
        %365 = sbr.rel (%p363) target = $region64
      $region63: #{mid_block_wrapper_forward.1} parent=55 // pred_region
        %p366 = scmp.lt.s32.totalorder %s18, 1
        %s367 = scalar_select %p366, %s18, 1
        %s368 = smul.addr %s367, 2
        %s369 = smul.addr %s368, 8
        %s370 = scalar_lea.vmem %s1, %s369
      $region64: #{mid_block_wrapper_forward.1} parent=55 // pred_fallthru
        _
    $region56: #{mid_block_wrapper_forward.1} parent=5 // pred_fallthru
      _
    %p371 = scmp.le.s32.totalorder 1, %s18
    %p372 = scmp.lt.s32.totalorder %s18, 3
    %p373 = pnand %p371, %p372
    %p374 = pneg %p373
    // Predicated region
    $region65: #{mid_block_wrapper_forward.1} parent=5 // pred_check
      _
    $region66: #{mid_block_wrapper_forward.1} parent=5 // pred_check_branch
      %376 = sbr.rel (%p373) target = $region68
    $region67: #{mid_block_wrapper_forward.1} parent=5 // pred_region
      %s377 = ssub.s32 %s18, 1
      %p378 = scmp.lt.s32.totalorder %s23, 1
      %s379 = scalar_select %p378, %s23, 1
      %s380 = smul.addr %s379, 2
      %s381 = smul.addr %s380, 8
      %s382 = scalar_lea.vmem %s0, %s381
      %p383 = pneg %p44
      %p384 = pneg %p41
      %p385 = scmp.lt.s32.totalorder %s23, 1
      %s386 = scalar_select %p385, %s23, 1
      %s387 = smul.addr %s386, 2
      %s388 = smul.addr %s387, 8
      %s389 = scalar_lea.vmem %s1, %s388
      %p390 = pneg %p70
      %p391 = pneg %p67
      %p392 = pneg %p91
      %p393 = pneg %p88
      %p394 = pneg %p112
      %p395 = pneg %p109
      %p396 = pneg %p133
      %p397 = pneg %p130
      %p398 = pneg %p154
      %p399 = pneg %p151
      %p400 = pneg %p175
      %p401 = pneg %p172
      %p402 = pneg %p196
      %p403 = pneg %p193
      %p404 = pneg %p217
      %p405 = pneg %p214
      %p406 = pneg %p238
      %p407 = pneg %p235
      %p408 = pneg %p259
      %p409 = pneg %p256
      %p410 = pneg %p280
      %p411 = pneg %p277
      %p412 = pneg %p306
      %p413 = pneg %p303
      %p414 = scmp.lt.s32.totalorder %s23, 1
      %s415 = scalar_select %p414, %s23, 1
      %s416 = smul.addr %s415, 2
      %s417 = smul.addr %s416, 8
      %s418 = scalar_lea.vmem %s12, %s417
      %p419 = scmp.lt.s32.totalorder %s23, 1
      %s420 = scalar_select %p419, %s23, 1
      %s421 = smul.addr %s420, 2
      %s422 = smul.addr %s421, 8
      %s423 = scalar_lea.vmem %s0, %s422
      %p424 = scmp.lt.s32.totalorder %s23, 1
      %s425 = scalar_select %p424, %s23, 1
      %s426 = smul.addr %s425, 2
      %s427 = smul.addr %s426, 8
      %s428 = scalar_lea.vmem %s1, %s427
      %p429 = scmp.lt.s32.totalorder %s23, 1
      %s430 = scalar_select %p429, %s23, 1
      %s431 = smul.addr %s430, 2
      %s432 = smul.addr %s431, 8
      %s433 = scalar_lea.vmem %s12, %s432
      %v435 = vld [vmem:[%s423] sm:$0xff]
      %v436 = vld [vmem:[%s423 + $0x8] sm:$0xff]
      %v437 = vld [vmem:[%s2] sm:$0xff]
      %v438 = vld [vmem:[%s4] sm:$0xff]
      %v439 = vld [vmem:[%s5] sm:$0xff]
      %vm440 = vcmask 64512
      %v442 = vsel %vm440, %v437, 0
      %444 = vmatprep.subr.mxu0 %v436
      %445 = vmatpush1.msra.mxu0 %v435
      %446 = vmatprep.subr.mxu0 0.0
      %447 = vmatpush1.msra.mxu0 0.0
      %448 = vmatprep.subr.mxu0 0.0
      %449 = vmatpush1.msra.mxu0 0.0
      %450 = vmatprep.subr.mxu0 0.0
      %451 = vmatpush1.msra.mxu0 0.0
      %452 = vmatprep.subr.mxu0 0.0
      %453 = vmatpush1.msra.mxu0 0.0
      %454 = vmatprep.subr.mxu0 0.0
      %455 = vmatpush1.msra.mxu0 0.0
      %456 = vmatprep.subr.mxu0 0.0
      %457 = vmatpush1.msra.mxu0 0.0
      %458 = vmatprep.subr.mxu0 0.0
      %459 = vmatpush1.msra.mxu0 0.0
      %460 = vmatprep.subr.mxu0 0.0
      %461 = vmatpush1.msra.mxu0 0.0
      %462 = vmatprep.subr.mxu0 0.0
      %463 = vmatpush1.msra.mxu0 0.0
      %464 = vmatprep.subr.mxu0 0.0
      %465 = vmatpush1.msra.mxu0 0.0
      %466 = vmatprep.subr.mxu0 0.0
      %467 = vmatpush1.msra.mxu0 0.0
      %468 = vmatprep.subr.mxu0 0.0
      %469 = vmatpush1.msra.mxu0 0.0
      %470 = vmatprep.subr.mxu0 0.0
      %471 = vmatpush1.msra.mxu0 0.0
      %472 = vmatprep.subr.mxu0 0.0
      %473 = vmatpush1.msra.mxu0 0.0
      %474 = vmatprep.subr.mxu0 0.0
      %475 = vmatpush1.msra.mxu0 0.0
      %476 = vmatprep.subr.mxu0 0.0
      %477 = vmatpush1.msra.mxu0 0.0
      %478 = vmatprep.subr.mxu0 0.0
      %479 = vmatpush1.msra.mxu0 0.0
      %480 = vmatprep.subr.mxu0 0.0
      %481 = vmatpush1.msra.mxu0 0.0
      %482 = vmatprep.subr.mxu0 0.0
      %483 = vmatpush1.msra.mxu0 0.0
      %484 = vmatprep.subr.mxu0 0.0
      %485 = vmatpush1.msra.mxu0 0.0
      %486 = vmatprep.subr.mxu0 0.0
      %487 = vmatpush1.msra.mxu0 0.0
      %488 = vmatprep.subr.mxu0 0.0
      %489 = vmatpush1.msra.mxu0 0.0
      %490 = vmatprep.subr.mxu0 0.0
      %491 = vmatpush1.msra.mxu0 0.0
      %492 = vmatprep.subr.mxu0 0.0
      %493 = vmatpush1.msra.mxu0 0.0
      %494 = vmatprep.subr.mxu0 0.0
      %495 = vmatpush1.msra.mxu0 0.0
      %496 = vmatprep.subr.mxu0 0.0
      %497 = vmatpush1.msra.mxu0 0.0
      %498 = vmatprep.subr.mxu0 0.0
      %499 = vmatpush1.msra.mxu0 0.0
      %500 = vmatprep.subr.mxu0 0.0
      %501 = vmatpush1.msra.mxu0 0.0
      %502 = vmatprep.subr.mxu0 0.0
      %503 = vmatpush1.msra.mxu0 0.0
      %504 = vmatprep.subr.mxu0 0.0
      %505 = vmatpush1.msra.mxu0 0.0
      %506 = vmatprep.subr.mxu0 0.0
      %507 = vmatpush1.msra.mxu0 0.0
      %508 = vmatprep.mubr.f32.mxu0 0.0
      %509 = vmatmul.mubr.f32.gmra.mrb[0].mxu0 %v442
      %v510 = vpop.f32.mrb[0].mxu0
      %v511 = vadd.f32 0.0, %v510
      %v512 = vpop.f32.mrb[0].mxu0
      %v513 = vadd.f32 0.0, %v512
      %514 = vdwg.mxu0
      %v515 = vadd.f32 %v511, %v513
      %516 = vadd.xlane.f32.xlu0 %v515
      %v517 = vpop.xlane.xlu0 %516
      %v518 = vmul.f32 %v517, 0.001953125
      %v519 = vsub.f32 %v435, %v518
      %v520 = vsub.f32 %v436, %v518
      %v521 = vmul.f32 %v519, %v519
      %v522 = vmul.f32 %v520, %v520
      %523 = vmatprep.subr.mxu0 %v522
      %524 = vmatpush1.msra.mxu0 %v521
      %525 = vmatprep.subr.mxu0 0.0
      %526 = vmatpush1.msra.mxu0 0.0
      %527 = vmatprep.subr.mxu0 0.0
      %528 = vmatpush1.msra.mxu0 0.0
      %529 = vmatprep.subr.mxu0 0.0
      %530 = vmatpush1.msra.mxu0 0.0
      %531 = vmatprep.subr.mxu0 0.0
      %532 = vmatpush1.msra.mxu0 0.0
      %533 = vmatprep.subr.mxu0 0.0
      %534 = vmatpush1.msra.mxu0 0.0
      %535 = vmatprep.subr.mxu0 0.0
      %536 = vmatpush1.msra.mxu0 0.0
      %537 = vmatprep.subr.mxu0 0.0
      %538 = vmatpush1.msra.mxu0 0.0
      %539 = vmatprep.subr.mxu0 0.0
      %540 = vmatpush1.msra.mxu0 0.0
      %541 = vmatprep.subr.mxu0 0.0
      %542 = vmatpush1.msra.mxu0 0.0
      %543 = vmatprep.subr.mxu0 0.0
      %544 = vmatpush1.msra.mxu0 0.0
      %545 = vmatprep.subr.mxu0 0.0
      %546 = vmatpush1.msra.mxu0 0.0
      %547 = vmatprep.subr.mxu0 0.0
      %548 = vmatpush1.msra.mxu0 0.0
      %549 = vmatprep.subr.mxu0 0.0
      %550 = vmatpush1.msra.mxu0 0.0
      %551 = vmatprep.subr.mxu0 0.0
      %552 = vmatpush1.msra.mxu0 0.0
      %553 = vmatprep.subr.mxu0 0.0
      %554 = vmatpush1.msra.mxu0 0.0
      %555 = vmatprep.subr.mxu0 0.0
      %556 = vmatpush1.msra.mxu0 0.0
      %557 = vmatprep.subr.mxu0 0.0
      %558 = vmatpush1.msra.mxu0 0.0
      %559 = vmatprep.subr.mxu0 0.0
      %560 = vmatpush1.msra.mxu0 0.0
      %561 = vmatprep.subr.mxu0 0.0
      %562 = vmatpush1.msra.mxu0 0.0
      %563 = vmatprep.subr.mxu0 0.0
      %564 = vmatpush1.msra.mxu0 0.0
      %565 = vmatprep.subr.mxu0 0.0
      %566 = vmatpush1.msra.mxu0 0.0
      %567 = vmatprep.subr.mxu0 0.0
      %568 = vmatpush1.msra.mxu0 0.0
      %569 = vmatprep.subr.mxu0 0.0
      %570 = vmatpush1.msra.mxu0 0.0
      %571 = vmatprep.subr.mxu0 0.0
      %572 = vmatpush1.msra.mxu0 0.0
      %573 = vmatprep.subr.mxu0 0.0
      %574 = vmatpush1.msra.mxu0 0.0
      %575 = vmatprep.subr.mxu0 0.0
      %576 = vmatpush1.msra.mxu0 0.0
      %577 = vmatprep.subr.mxu0 0.0
      %578 = vmatpush1.msra.mxu0 0.0
      %579 = vmatprep.subr.mxu0 0.0
      %580 = vmatpush1.msra.mxu0 0.0
      %581 = vmatprep.subr.mxu0 0.0
      %582 = vmatpush1.msra.mxu0 0.0
      %583 = vmatprep.subr.mxu0 0.0
      %584 = vmatpush1.msra.mxu0 0.0
      %585 = vmatprep.subr.mxu0 0.0
      %586 = vmatpush1.msra.mxu0 0.0
      %587 = vmatprep.mubr.f32.mxu0 0.0
      %588 = vmatmul.mubr.f32.gmra.mrb[0].mxu0 %v442
      %v589 = vpop.f32.mrb[0].mxu0
      %v590 = vadd.f32 0.0, %v589
      %v591 = vpop.f32.mrb[0].mxu0
      %v592 = vadd.f32 0.0, %v591
      %593 = vdwg.mxu0
      %v594 = vadd.f32 %v590, %v592
      %595 = vadd.xlane.f32.xlu0 %v594
      %v596 = vpop.xlane.xlu0 %595
      %v597 = vmul.f32 %v596, 0.001953125
      %v598 = vadd.f32 %v597, 1e-05
      %v599 = vrsqrt.pop %v598
      %v600 = vmul.f32 %v519, %v599
      %v601 = vmul.f32 %v520, %v599
      %603 = vset.pattern.permute.xlu0 0
      %604 = vperm.xlu0 %603, %v438
      %v605 = vpop.permute.xlu0 %604
      %v607 = vmul.f32 %v600, %v605
      %v608 = vmul.f32 %v601, %v605
      %610 = vset.pattern.permute.xlu0 0
      %611 = vperm.xlu0 %610, %v439
      %v612 = vpop.permute.xlu0 %611
      %v614 = vadd.f32 %v607, %v612
      %v615 = vadd.f32 %v608, %v612
      %v616 = vxor.u32 %v614, 2147483648
      %v617 = vxor.u32 %v615, 2147483648
      %v618 = vmul.f32 %v616, 1.442695
      %v619 = vpow.pop %v618
      %v620 = vmul.f32 %v617, 1.442695
      %v621 = vpow.pop %v620
      %v622 = vadd.f32 %v619, 1.0
      %v623 = vadd.f32 %v621, 1.0
      %v624 = vrcp.pop %v622
      %v625 = vmul.f32 1.0, %v624
      %v626 = vrcp.pop %v623
      %v627 = vmul.f32 1.0, %v626
      %v628 = vmul.f32 %v614, %v625
      %v629 = vmul.f32 %v615, %v627
      %v630 = vld [vmem:[%s6] sm:$0xf]
      %v631 = vld [vmem:[%s7] sm:$0xff]
      %633 = vrot.lane.b32.xlu0 %v629, 17
      %v634 = vpop.permute.xlu0 %633
      %637 = vrot.lane.b32.xlu0 %v628, 17
      %v638 = vpop.permute.xlu0 %637
      %vm639 = vcmask 138240
      %v640 = vsel %vm639, %v638, %v634
      %v643 = vsel %vm639, %v634, %v638
      %v644 = vld [vmem:[%s3] sm:$0x3]
      %v646 = vlaneseq
      %v647 = vshrl.u32 %v646, 7
      %v648 = vsub.s32 0, %v647
      %v649 = vrot.slane %v644, %v648
      %v650 = vlaneseq
      %v651 = vshrl.u32 %v650, 7
      %v652 = vsub.s32 1, %v651
      %v653 = vrot.slane %v644, %v652
      %v656 = vmul.f32 %v643, %v649
      %v657 = vmul.f32 %v640, %v653
      %658 = vrot.lane.b32.xlu0 %v629, 16
      %v659 = vpop.permute.xlu0 %658
      %661 = vrot.lane.b32.xlu0 %v628, 16
      %v662 = vpop.permute.xlu0 %661
      %vm663 = vcmask 130048
      %v664 = vsel %vm663, %v662, %v659
      %v667 = vsel %vm663, %v659, %v662
      %s668 = scalar_lea.vmem %s3, 2
      %v669 = vld [vmem:[%s668] sm:$0x3]
      %v671 = vlaneseq
      %v672 = vshrl.u32 %v671, 7
      %v673 = vsub.s32 0, %v672
      %v674 = vrot.slane %v669, %v673
      %v675 = vlaneseq
      %v676 = vshrl.u32 %v675, 7
      %v677 = vsub.s32 1, %v676
      %v678 = vrot.slane %v669, %v677
      %v681 = vmul.f32 %v667, %v674
      %v682 = vmul.f32 %v664, %v678
      %683 = vrot.lane.b32.xlu0 %v629, 15
      %v684 = vpop.permute.xlu0 %683
      %686 = vrot.lane.b32.xlu0 %v628, 15
      %v687 = vpop.permute.xlu0 %686
      %vm688 = vcmask 121856
      %v689 = vsel %vm688, %v687, %v684
      %v692 = vsel %vm688, %v684, %v687
      %s693 = scalar_lea.vmem %s3, 4
      %v694 = vld [vmem:[%s693] sm:$0x3]
      %v696 = vlaneseq
      %v697 = vshrl.u32 %v696, 7
      %v698 = vsub.s32 0, %v697
      %v699 = vrot.slane %v694, %v698
      %v700 = vlaneseq
      %v701 = vshrl.u32 %v700, 7
      %v702 = vsub.s32 1, %v701
      %v703 = vrot.slane %v694, %v702
      %v706 = vmul.f32 %v692, %v699
      %v707 = vmul.f32 %v689, %v703
      %708 = vrot.lane.b32.xlu0 %v629, 1
      %v709 = vpop.permute.xlu0 %708
      %711 = vrot.lane.b32.xlu0 %v628, 1
      %v712 = vpop.permute.xlu0 %711
      %vm713 = vcmask 7168
      %v714 = vsel %vm713, %v712, %v709
      %v717 = vsel %vm713, %v709, %v712
      %s718 = scalar_lea.vmem %s3, 6
      %v719 = vld [vmem:[%s718] sm:$0x3]
      %v721 = vlaneseq
      %v722 = vshrl.u32 %v721, 7
      %v723 = vsub.s32 0, %v722
      %v724 = vrot.slane %v719, %v723
      %v725 = vlaneseq
      %v726 = vshrl.u32 %v725, 7
      %v727 = vsub.s32 1, %v726
      %v728 = vrot.slane %v719, %v727
      %v731 = vmul.f32 %v717, %v724
      %v732 = vmul.f32 %v714, %v728
      %s733 = scalar_lea.vmem %s3, 8
      %v734 = vld [vmem:[%s733] sm:$0x3]
      %v736 = vlaneseq
      %v737 = vshrl.u32 %v736, 7
      %v738 = vsub.s32 0, %v737
      %v739 = vrot.slane %v734, %v738
      %v740 = vlaneseq
      %v741 = vshrl.u32 %v740, 7
      %v742 = vsub.s32 1, %v741
      %v743 = vrot.slane %v734, %v742
      %v746 = vmul.f32 %v628, %v739
      %v747 = vmul.f32 %v629, %v743
      %748 = vrot.lane.b32.xlu0 %v628, 127
      %v749 = vpop.permute.xlu0 %748
      %750 = vrot.lane.b32.xlu0 %v629, 127
      %v751 = vpop.permute.xlu0 %750
      %vm752 = vcmask 1039360
      %v753 = vsel %vm752, %v749, %v751
      %v757 = vsel %vm752, %v751, %v749
      %s758 = scalar_lea.vmem %s3, 10
      %v759 = vld [vmem:[%s758] sm:$0x3]
      %v761 = vlaneseq
      %v762 = vshrl.u32 %v761, 7
      %v763 = vsub.s32 0, %v762
      %v764 = vrot.slane %v759, %v763
      %v765 = vlaneseq
      %v766 = vshrl.u32 %v765, 7
      %v767 = vsub.s32 1, %v766
      %v768 = vrot.slane %v759, %v767
      %v771 = vmul.f32 %v753, %v764
      %v772 = vmul.f32 %v757, %v768
      %773 = vrot.lane.b32.xlu0 %v628, 113
      %v774 = vpop.permute.xlu0 %773
      %775 = vrot.lane.b32.xlu0 %v629, 113
      %v776 = vpop.permute.xlu0 %775
      %vm777 = vcmask 924672
      %v778 = vsel %vm777, %v774, %v776
      %v782 = vsel %vm777, %v776, %v774
      %s783 = scalar_lea.vmem %s3, 12
      %v784 = vld [vmem:[%s783] sm:$0x3]
      %v786 = vlaneseq
      %v787 = vshrl.u32 %v786, 7
      %v788 = vsub.s32 0, %v787
      %v789 = vrot.slane %v784, %v788
      %v790 = vlaneseq
      %v791 = vshrl.u32 %v790, 7
      %v792 = vsub.s32 1, %v791
      %v793 = vrot.slane %v784, %v792
      %v796 = vmul.f32 %v778, %v789
      %v797 = vmul.f32 %v782, %v793
      %798 = vrot.lane.b32.xlu0 %v628, 112
      %v799 = vpop.permute.xlu0 %798
      %800 = vrot.lane.b32.xlu0 %v629, 112
      %v801 = vpop.permute.xlu0 %800
      %vm802 = vcmask 916480
      %v803 = vsel %vm802, %v799, %v801
      %v807 = vsel %vm802, %v801, %v799
      %s808 = scalar_lea.vmem %s3, 14
      %v809 = vld [vmem:[%s808] sm:$0x3]
      %v811 = vlaneseq
      %v812 = vshrl.u32 %v811, 7
      %v813 = vsub.s32 0, %v812
      %v814 = vrot.slane %v809, %v813
      %v815 = vlaneseq
      %v816 = vshrl.u32 %v815, 7
      %v817 = vsub.s32 1, %v816
      %v818 = vrot.slane %v809, %v817
      %v821 = vmul.f32 %v803, %v814
      %v822 = vmul.f32 %v807, %v818
      %823 = vrot.lane.b32.xlu0 %v628, 111
      %v824 = vpop.permute.xlu0 %823
      %825 = vrot.lane.b32.xlu0 %v629, 111
      %v826 = vpop.permute.xlu0 %825
      %vm827 = vcmask 908288
      %v828 = vsel %vm827, %v824, %v826
      %v832 = vsel %vm827, %v826, %v824
      %s833 = scalar_lea.vmem %s3, 16
      %v834 = vld [vmem:[%s833] sm:$0x3]
      %v836 = vlaneseq
      %v837 = vshrl.u32 %v836, 7
      %v838 = vsub.s32 0, %v837
      %v839 = vrot.slane %v834, %v838
      %v840 = vlaneseq
      %v841 = vshrl.u32 %v840, 7
      %v842 = vsub.s32 1, %v841
      %v843 = vrot.slane %v834, %v842
      %v846 = vmul.f32 %v828, %v839
      %v847 = vmul.f32 %v832, %v843
      %v848 = vpack.c.bf16 %v681, %v656
      %v849 = vpack.c.bf16 %v682, %v657
      %v850 = vpack.c.bf16 %v731, %v706
      %v851 = vpack.c.bf16 %v732, %v707
      %v852 = vpack.c.bf16 %v771, %v746
      %v853 = vpack.c.bf16 %v772, %v747
      %v854 = vpack.c.bf16 %v821, %v796
      %v855 = vpack.c.bf16 %v822, %v797
      %v856 = vpack.c.bf16 %v846, %v846
      %v857 = vpack.c.bf16 %v847, %v847
      %859 = vset.pattern.permute.xlu0 0
      %860 = vperm.xlu0 %859, %v631
      %v861 = vpop.permute.xlu0 %860
      %vm863 = vcmask 588800
      %v865 = vsel %vm863, %v630, 0
      %vm867 = vcmask 1043456
      %v869 = vsel %vm867, %v856, 0
      %v872 = vsel %vm867, %v857, 0
      %874 = vmatprep.subr.bf16.mxu0 %v849
      %875 = vmatpush1.bf16.msra.mxu0 %v848
      %876 = vmatprep.subr.bf16.mxu0 %v851
      %877 = vmatpush1.bf16.msra.mxu0 %v850
      %878 = vmatprep.subr.bf16.mxu0 %v853
      %879 = vmatpush1.bf16.msra.mxu0 %v852
      %880 = vmatprep.subr.bf16.mxu0 %v855
      %881 = vmatpush1.bf16.msra.mxu0 %v854
      %882 = vmatprep.subr.bf16.mxu0 %v872
      %883 = vmatpush1.bf16.msra.mxu0 %v869
      %884 = vmatprep.subr.bf16.mxu0 0
      %885 = vmatpush1.bf16.msra.mxu0 0
      %886 = vmatprep.subr.bf16.mxu0 0
      %887 = vmatpush1.bf16.msra.mxu0 0
      %888 = vmatprep.subr.bf16.mxu0 0
      %889 = vmatpush1.bf16.msra.mxu0 0
      %890 = vmatprep.subr.bf16.mxu0 0
      %891 = vmatpush1.bf16.msra.mxu0 0
      %892 = vmatprep.subr.bf16.mxu0 0
      %893 = vmatpush1.bf16.msra.mxu0 0
      %894 = vmatprep.subr.bf16.mxu0 0
      %895 = vmatpush1.bf16.msra.mxu0 0
      %896 = vmatprep.subr.bf16.mxu0 0
      %897 = vmatpush1.bf16.msra.mxu0 0
      %898 = vmatprep.subr.bf16.mxu0 0
      %899 = vmatpush1.bf16.msra.mxu0 0
      %900 = vmatprep.subr.bf16.mxu0 0
      %901 = vmatpush1.bf16.msra.mxu0 0
      %902 = vmatprep.subr.bf16.mxu0 0
      %903 = vmatpush1.bf16.msra.mxu0 0
      %904 = vmatprep.subr.bf16.mxu0 0
      %905 = vmatpush1.bf16.msra.mxu0 0
      %906 = vmatprep.mubr.bf16.mxu0 0
      %907 = vmatmul.mubr.bf16.gmra.mrb[0].mxu0 %v865
      %v908 = vpop.f32.mrb[0].mxu0
      %v909 = vadd.f32 %v861, %v908
      %v910 = vpop.f32.mrb[0].mxu0
      %v911 = vadd.f32 %v861, %v910
      %v912 = vpop.f32.mrb[0].mxu0
      %v913 = vpop.f32.mrb[0].mxu0
      %914 = vdwg.mxu0
      %v915 = vld [vmem:[%s8] sm:$0xff]
      %v916 = vld [vmem:[%s9] sm:$0xff]
      %917 = vmatprep.subr.mxu0 %v911
      %918 = vmatpush1.msra.mxu0 %v909
      %919 = vmatprep.subr.mxu0 0.0
      %920 = vmatpush1.msra.mxu0 0.0
      %921 = vmatprep.subr.mxu0 0.0
      %922 = vmatpush1.msra.mxu0 0.0
      %923 = vmatprep.subr.mxu0 0.0
      %924 = vmatpush1.msra.mxu0 0.0
      %925 = vmatprep.subr.mxu0 0.0
      %926 = vmatpush1.msra.mxu0 0.0
      %927 = vmatprep.subr.mxu0 0.0
      %928 = vmatpush1.msra.mxu0 0.0
      %929 = vmatprep.subr.mxu0 0.0
      %930 = vmatpush1.msra.mxu0 0.0
      %931 = vmatprep.subr.mxu0 0.0
      %932 = vmatpush1.msra.mxu0 0.0
      %933 = vmatprep.subr.mxu0 0.0
      %934 = vmatpush1.msra.mxu0 0.0
      %935 = vmatprep.subr.mxu0 0.0
      %936 = vmatpush1.msra.mxu0 0.0
      %937 = vmatprep.subr.mxu0 0.0
      %938 = vmatpush1.msra.mxu0 0.0
      %939 = vmatprep.subr.mxu0 0.0
      %940 = vmatpush1.msra.mxu0 0.0
      %941 = vmatprep.subr.mxu0 0.0
      %942 = vmatpush1.msra.mxu0 0.0
      %943 = vmatprep.subr.mxu0 0.0
      %944 = vmatpush1.msra.mxu0 0.0
      %945 = vmatprep.subr.mxu0 0.0
      %946 = vmatpush1.msra.mxu0 0.0
      %947 = vmatprep.subr.mxu0 0.0
      %948 = vmatpush1.msra.mxu0 0.0
      %949 = vmatprep.subr.mxu0 0.0
      %950 = vmatpush1.msra.mxu0 0.0
      %951 = vmatprep.subr.mxu0 0.0
      %952 = vmatpush1.msra.mxu0 0.0
      %953 = vmatprep.subr.mxu0 0.0
      %954 = vmatpush1.msra.mxu0 0.0
      %955 = vmatprep.subr.mxu0 0.0
      %956 = vmatpush1.msra.mxu0 0.0
      %957 = vmatprep.subr.mxu0 0.0
      %958 = vmatpush1.msra.mxu0 0.0
      %959 = vmatprep.subr.mxu0 0.0
      %960 = vmatpush1.msra.mxu0 0.0
      %961 = vmatprep.subr.mxu0 0.0
      %962 = vmatpush1.msra.mxu0 0.0
      %963 = vmatprep.subr.mxu0 0.0
      %964 = vmatpush1.msra.mxu0 0.0
      %965 = vmatprep.subr.mxu0 0.0
      %966 = vmatpush1.msra.mxu0 0.0
      %967 = vmatprep.subr.mxu0 0.0
      %968 = vmatpush1.msra.mxu0 0.0
      %969 = vmatprep.subr.mxu0 0.0
      %970 = vmatpush1.msra.mxu0 0.0
      %971 = vmatprep.subr.mxu0 0.0
      %972 = vmatpush1.msra.mxu0 0.0
      %973 = vmatprep.subr.mxu0 0.0
      %974 = vmatpush1.msra.mxu0 0.0
      %975 = vmatprep.subr.mxu0 0.0
      %976 = vmatpush1.msra.mxu0 0.0
      %977 = vmatprep.subr.mxu0 0.0
      %978 = vmatpush1.msra.mxu0 0.0
      %979 = vmatprep.subr.mxu0 0.0
      %980 = vmatpush1.msra.mxu0 0.0
      %981 = vmatprep.mubr.f32.mxu0 0.0
      %982 = vmatmul.mubr.f32.gmra.mrb[0].mxu0 %v442
      %v983 = vpop.f32.mrb[0].mxu0
      %v984 = vadd.f32 0.0, %v983
      %v985 = vpop.f32.mrb[0].mxu0
      %v986 = vadd.f32 0.0, %v985
      %987 = vdwg.mxu0
      %v988 = vadd.f32 %v984, %v986
      %989 = vadd.xlane.f32.xlu0 %v988
      %v990 = vpop.xlane.xlu0 %989
      %v991 = vmul.f32 %v990, 0.001953125
      %v992 = vsub.f32 %v909, %v991
      %v993 = vsub.f32 %v911, %v991
      %v994 = vmul.f32 %v992, %v992
      %v995 = vmul.f32 %v993, %v993
      %996 = vmatprep.subr.mxu0 %v995
      %997 = vmatpush1.msra.mxu0 %v994
      %998 = vmatprep.subr.mxu0 0.0
      %999 = vmatpush1.msra.mxu0 0.0
      %1000 = vmatprep.subr.mxu0 0.0
      %1001 = vmatpush1.msra.mxu0 0.0
      %1002 = vmatprep.subr.mxu0 0.0
      %1003 = vmatpush1.msra.mxu0 0.0
      %1004 = vmatprep.subr.mxu0 0.0
      %1005 = vmatpush1.msra.mxu0 0.0
      %1006 = vmatprep.subr.mxu0 0.0
      %1007 = vmatpush1.msra.mxu0 0.0
      %1008 = vmatprep.subr.mxu0 0.0
      %1009 = vmatpush1.msra.mxu0 0.0
      %1010 = vmatprep.subr.mxu0 0.0
      %1011 = vmatpush1.msra.mxu0 0.0
      %1012 = vmatprep.subr.mxu0 0.0
      %1013 = vmatpush1.msra.mxu0 0.0
      %1014 = vmatprep.subr.mxu0 0.0
      %1015 = vmatpush1.msra.mxu0 0.0
      %1016 = vmatprep.subr.mxu0 0.0
      %1017 = vmatpush1.msra.mxu0 0.0
      %1018 = vmatprep.subr.mxu0 0.0
      %1019 = vmatpush1.msra.mxu0 0.0
      %1020 = vmatprep.subr.mxu0 0.0
      %1021 = vmatpush1.msra.mxu0 0.0
      %1022 = vmatprep.subr.mxu0 0.0
      %1023 = vmatpush1.msra.mxu0 0.0
      %1024 = vmatprep.subr.mxu0 0.0
      %1025 = vmatpush1.msra.mxu0 0.0
      %1026 = vmatprep.subr.mxu0 0.0
      %1027 = vmatpush1.msra.mxu0 0.0
      %1028 = vmatprep.subr.mxu0 0.0
      %1029 = vmatpush1.msra.mxu0 0.0
      %1030 = vmatprep.subr.mxu0 0.0
      %1031 = vmatpush1.msra.mxu0 0.0
      %1032 = vmatprep.subr.mxu0 0.0
      %1033 = vmatpush1.msra.mxu0 0.0
      %1034 = vmatprep.subr.mxu0 0.0
      %1035 = vmatpush1.msra.mxu0 0.0
      %1036 = vmatprep.subr.mxu0 0.0
      %1037 = vmatpush1.msra.mxu0 0.0
      %1038 = vmatprep.subr.mxu0 0.0
      %1039 = vmatpush1.msra.mxu0 0.0
      %1040 = vmatprep.subr.mxu0 0.0
      %1041 = vmatpush1.msra.mxu0 0.0
      %1042 = vmatprep.subr.mxu0 0.0
      %1043 = vmatpush1.msra.mxu0 0.0
      %1044 = vmatprep.subr.mxu0 0.0
      %1045 = vmatpush1.msra.mxu0 0.0
      %1046 = vmatprep.subr.mxu0 0.0
      %1047 = vmatpush1.msra.mxu0 0.0
      %1048 = vmatprep.subr.mxu0 0.0
      %1049 = vmatpush1.msra.mxu0 0.0
      %1050 = vmatprep.subr.mxu0 0.0
      %1051 = vmatpush1.msra.mxu0 0.0
      %1052 = vmatprep.subr.mxu0 0.0
      %1053 = vmatpush1.msra.mxu0 0.0
      %1054 = vmatprep.subr.mxu0 0.0
      %1055 = vmatpush1.msra.mxu0 0.0
      %1056 = vmatprep.subr.mxu0 0.0
      %1057 = vmatpush1.msra.mxu0 0.0
      %1058 = vmatprep.subr.mxu0 0.0
      %1059 = vmatpush1.msra.mxu0 0.0
      %1060 = vmatprep.mubr.f32.mxu0 0.0
      %1061 = vmatmul.mubr.f32.gmra.mrb[0].mxu0 %v442
      %v1062 = vpop.f32.mrb[0].mxu0
      %v1063 = vadd.f32 0.0, %v1062
      %v1064 = vpop.f32.mrb[0].mxu0
      %v1065 = vadd.f32 0.0, %v1064
      %1066 = vdwg.mxu0
      %v1067 = vadd.f32 %v1063, %v1065
      %1068 = vadd.xlane.f32.xlu0 %v1067
      %v1069 = vpop.xlane.xlu0 %1068
      %v1070 = vmul.f32 %v1069, 0.001953125
      %v1071 = vadd.f32 %v1070, 1e-05
      %v1072 = vrsqrt.pop %v1071
      %v1073 = vmul.f32 %v992, %v1072
      %v1074 = vmul.f32 %v993, %v1072
      %1076 = vset.pattern.permute.xlu0 0
      %1077 = vperm.xlu0 %1076, %v915
      %v1078 = vpop.permute.xlu0 %1077
      %v1080 = vmul.f32 %v1073, %v1078
      %v1081 = vmul.f32 %v1074, %v1078
      %1083 = vset.pattern.permute.xlu0 0
      %1084 = vperm.xlu0 %1083, %v916
      %v1085 = vpop.permute.xlu0 %1084
      %v1087 = vadd.f32 %v1080, %v1085
      %v1088 = vadd.f32 %v1081, %v1085
      %v1089 = vxor.u32 %v1087, 2147483648
      %v1090 = vxor.u32 %v1088, 2147483648
      %v1091 = vmul.f32 %v1089, 1.442695
      %v1092 = vpow.pop %v1091
      %v1093 = vmul.f32 %v1090, 1.442695
      %v1094 = vpow.pop %v1093
      %v1095 = vadd.f32 %v1092, 1.0
      %v1096 = vadd.f32 %v1094, 1.0
      %v1097 = vrcp.pop %v1095
      %v1098 = vmul.f32 1.0, %v1097
      %v1099 = vrcp.pop %v1096
      %v1100 = vmul.f32 1.0, %v1099
      %v1101 = vmul.f32 %v1087, %v1098
      %v1102 = vmul.f32 %v1088, %v1100
      %v1103 = vld [vmem:[%s10] sm:$0xf]
      %v1104 = vld [vmem:[%s11] sm:$0xff]
      %1106 = vrot.lane.b32.xlu0 %v1102, 17
      %v1107 = vpop.permute.xlu0 %1106
      %1110 = vrot.lane.b32.xlu0 %v1101, 17
      %v1111 = vpop.permute.xlu0 %1110
      %v1112 = vsel %vm639, %v1111, %v1107
      %v1115 = vsel %vm639, %v1107, %v1111
      %v1116 = vmul.f32 %v1115, %v649
      %v1117 = vmul.f32 %v1112, %v653
      %1118 = vrot.lane.b32.xlu0 %v1102, 16
      %v1119 = vpop.permute.xlu0 %1118
      %1121 = vrot.lane.b32.xlu0 %v1101, 16
      %v1122 = vpop.permute.xlu0 %1121
      %v1123 = vsel %vm663, %v1122, %v1119
      %v1126 = vsel %vm663, %v1119, %v1122
      %v1127 = vmul.f32 %v1126, %v674
      %v1128 = vmul.f32 %v1123, %v678
      %1129 = vrot.lane.b32.xlu0 %v1102, 15
      %v1130 = vpop.permute.xlu0 %1129
      %1132 = vrot.lane.b32.xlu0 %v1101, 15
      %v1133 = vpop.permute.xlu0 %1132
      %v1134 = vsel %vm688, %v1133, %v1130
      %v1137 = vsel %vm688, %v1130, %v1133
      %v1138 = vmul.f32 %v1137, %v699
      %v1139 = vmul.f32 %v1134, %v703
      %1140 = vrot.lane.b32.xlu0 %v1102, 1
      %v1141 = vpop.permute.xlu0 %1140
      %1143 = vrot.lane.b32.xlu0 %v1101, 1
      %v1144 = vpop.permute.xlu0 %1143
      %v1145 = vsel %vm713, %v1144, %v1141
      %v1148 = vsel %vm713, %v1141, %v1144
      %v1149 = vmul.f32 %v1148, %v724
      %v1150 = vmul.f32 %v1145, %v728
      %v1151 = vmul.f32 %v1101, %v739
      %v1152 = vmul.f32 %v1102, %v743
      %1153 = vrot.lane.b32.xlu0 %v1101, 127
      %v1154 = vpop.permute.xlu0 %1153
      %1155 = vrot.lane.b32.xlu0 %v1102, 127
      %v1156 = vpop.permute.xlu0 %1155
      %v1157 = vsel %vm752, %v1154, %v1156
      %v1161 = vsel %vm752, %v1156, %v1154
      %v1162 = vmul.f32 %v1157, %v764
      %v1163 = vmul.f32 %v1161, %v768
      %1164 = vrot.lane.b32.xlu0 %v1101, 113
      %v1165 = vpop.permute.xlu0 %1164
      %1166 = vrot.lane.b32.xlu0 %v1102, 113
      %v1167 = vpop.permute.xlu0 %1166
      %v1168 = vsel %vm777, %v1165, %v1167
      %v1172 = vsel %vm777, %v1167, %v1165
      %v1173 = vmul.f32 %v1168, %v789
      %v1174 = vmul.f32 %v1172, %v793
      %1175 = vrot.lane.b32.xlu0 %v1101, 112
      %v1176 = vpop.permute.xlu0 %1175
      %1177 = vrot.lane.b32.xlu0 %v1102, 112
      %v1178 = vpop.permute.xlu0 %1177
      %v1179 = vsel %vm802, %v1176, %v1178
      %v1183 = vsel %vm802, %v1178, %v1176
      %v1184 = vmul.f32 %v1179, %v814
      %v1185 = vmul.f32 %v1183, %v818
      %1186 = vrot.lane.b32.xlu0 %v1101, 111
      %v1187 = vpop.permute.xlu0 %1186
      %1188 = vrot.lane.b32.xlu0 %v1102, 111
      %v1189 = vpop.permute.xlu0 %1188
      %v1190 = vsel %vm827, %v1187, %v1189
      %v1194 = vsel %vm827, %v1189, %v1187
      %v1195 = vmul.f32 %v1190, %v839
      %v1196 = vmul.f32 %v1194, %v843
      %v1197 = vpack.c.bf16 %v1127, %v1116
      %v1198 = vpack.c.bf16 %v1128, %v1117
      %v1199 = vpack.c.bf16 %v1149, %v1138
      %v1200 = vpack.c.bf16 %v1150, %v1139
      %v1201 = vpack.c.bf16 %v1162, %v1151
      %v1202 = vpack.c.bf16 %v1163, %v1152
      %v1203 = vpack.c.bf16 %v1184, %v1173
      %v1204 = vpack.c.bf16 %v1185, %v1174
      %v1205 = vpack.c.bf16 %v1195, %v1195
      %v1206 = vpack.c.bf16 %v1196, %v1196
      %1208 = vset.pattern.permute.xlu0 0
      %1209 = vperm.xlu0 %1208, %v1104
      %v1210 = vpop.permute.xlu0 %1209
      %v1213 = vsel %vm863, %v1103, 0
      %v1216 = vsel %vm867, %v1205, 0
      %v1219 = vsel %vm867, %v1206, 0
      %1221 = vmatprep.subr.bf16.mxu0 %v1198
      %1222 = vmatpush1.bf16.msra.mxu0 %v1197
      %1223 = vmatprep.subr.bf16.mxu0 %v1200
      %1224 = vmatpush1.bf16.msra.mxu0 %v1199
      %1225 = vmatprep.subr.bf16.mxu0 %v1202
      %1226 = vmatpush1.bf16.msra.mxu0 %v1201
      %1227 = vmatprep.subr.bf16.mxu0 %v1204
      %1228 = vmatpush1.bf16.msra.mxu0 %v1203
      %1229 = vmatprep.subr.bf16.mxu0 %v1219
      %1230 = vmatpush1.bf16.msra.mxu0 %v1216
      %1231 = vmatprep.subr.bf16.mxu0 0
      %1232 = vmatpush1.bf16.msra.mxu0 0
      %1233 = vmatprep.subr.bf16.mxu0 0
      %1234 = vmatpush1.bf16.msra.mxu0 0
      %1235 = vmatprep.subr.bf16.mxu0 0
      %1236 = vmatpush1.bf16.msra.mxu0 0
      %1237 = vmatprep.subr.bf16.mxu0 0
      %1238 = vmatpush1.bf16.msra.mxu0 0
      %1239 = vmatprep.subr.bf16.mxu0 0
      %1240 = vmatpush1.bf16.msra.mxu0 0
      %1241 = vmatprep.subr.bf16.mxu0 0
      %1242 = vmatpush1.bf16.msra.mxu0 0
      %1243 = vmatprep.subr.bf16.mxu0 0
      %1244 = vmatpush1.bf16.msra.mxu0 0
      %1245 = vmatprep.subr.bf16.mxu0 0
      %1246 = vmatpush1.bf16.msra.mxu0 0
      %1247 = vmatprep.subr.bf16.mxu0 0
      %1248 = vmatpush1.bf16.msra.mxu0 0
      %1249 = vmatprep.subr.bf16.mxu0 0
      %1250 = vmatpush1.bf16.msra.mxu0 0
      %1251 = vmatprep.subr.bf16.mxu0 0
      %1252 = vmatpush1.bf16.msra.mxu0 0
      %1253 = vmatprep.mubr.bf16.mxu0 0
      %1254 = vmatmul.mubr.bf16.gmra.mrb[0].mxu0 %v1213
      %v1255 = vpop.f32.mrb[0].mxu0
      %v1256 = vadd.f32 %v1210, %v1255
      %v1257 = vpop.f32.mrb[0].mxu0
      %v1258 = vadd.f32 %v1210, %v1257
      %v1259 = vpop.f32.mrb[0].mxu0
      %v1260 = vpop.f32.mrb[0].mxu0
      %1261 = vdwg.mxu0
      %v1262 = vadd.f32 %v435, %v1256
      %v1263 = vadd.f32 %v436, %v1258
      %v1264 = vld [vmem:[%s428] sm:$0xff]
      %v1265 = vld [vmem:[%s428 + $0x8] sm:$0xff]
      %v1266 = vadd.f32 %v1262, %v1264
      %v1267 = vadd.f32 %v1263, %v1265
      %1268 = vst [vmem:[%s433] sm:$0xff] %v1266
      %1269 = vst [vmem:[%s433 + $0x8] sm:$0xff] %v1267
      %p1270 = scmp.lt.s32.totalorder %s23, 1
      %s1271 = scalar_select %p1270, %s23, 1
      %s1272 = smul.addr %s1271, 2
      %s1273 = smul.addr %s1272, 8
      %s1274 = scalar_lea.vmem %s12, %s1273
      // Predicated region
      $region69: #{mid_block_wrapper_forward.1} parent=67 // pred_check
        %p1275 = pneg %p303
      $region70: #{mid_block_wrapper_forward.1} parent=67 // pred_check_branch
        %1277 = sbr.rel (%p1275) target = $region72
      $region71: #{mid_block_wrapper_forward.1} parent=67 // pred_region
        _
      $region72: #{mid_block_wrapper_forward.1} parent=67 // pred_fallthru
        _
    $region68: #{mid_block_wrapper_forward.1} parent=5 // pred_fallthru
      _
    %p1278 = scmp.le.s32.totalorder 2, %s18
    // Predicated region
    $region73: #{mid_block_wrapper_forward.1} parent=5 // pred_check
      %p1279 = pneg %p1278
    $region74: #{mid_block_wrapper_forward.1} parent=5 // pred_check_branch
      %1281 = sbr.rel (%p1279) target = $region76
    $region75: #{mid_block_wrapper_forward.1} parent=5 // pred_region
      %s1282 = ssub.s32 %s18, 2
      // Predicated region
      $region77: #{mid_block_wrapper_forward.1} parent=75 // pred_check
        %p1283 = pneg %p309
      $region78: #{mid_block_wrapper_forward.1} parent=75 // pred_check_branch
        %1285 = sbr.rel (%p1283) target = $region80
      $region79: #{mid_block_wrapper_forward.1} parent=75 // pred_region
        %p1286 = scmp.lt.s32.totalorder %s24, 1
        %s1287 = scalar_select %p1286, %s24, 1
        %s1288 = smul.addr %s1287, 2
        %s1289 = smul.addr %s1288, 8
        %s1290 = scalar_lea.vmem %s12, %s1289
      $region80: #{mid_block_wrapper_forward.1} parent=75 // pred_fallthru
        _
    $region76: #{mid_block_wrapper_forward.1} parent=5 // pred_fallthru
      _
  $region6: #{mid_block_wrapper_forward.1} parent=0 // loop_footer
    %s22 = sadd.s32 1, %s18
  $region7: #{mid_block_wrapper_forward.1} parent=0 // loop_footer_branch
    %17 = sbr.rel target = $region3
  $region8: #{mid_block_wrapper_forward.1} parent=0 // loop_exit
    _

</llo_original>
